<compile_context>
chip_gen: v5e
topology: v5e:2x2
jax: 0.10.0
libtpu: 0.0.40
codegen_flags: <defaults>
</compile_context>

<pallas_src>
import functools

import jax
import jax.numpy as jnp
from jax import lax
from jax.experimental import pallas as pl
from jax.experimental.pallas import tpu as pltpu


def encoder_layer_kernel(xres_ref, xpk_ref, xv_ref,
                         wq_ref, wk_ref, wv_ref,
                         ln1_w_ref, ln1_b_ref,
                         w1_ref, b1_ref, w2_ref, b2_ref,
                         ln2_w_ref, ln2_b_ref,
                         out_ref,
                         k_hm_ref, v_hm_ref, q_hm_ref, o_hm_ref,
                         *, num_heads, eps, exp_dtype):
    f32 = jnp.float32
    bf16 = jnp.bfloat16

    qi = pl.program_id(1)
    N = xpk_ref.shape[1]          # full sequence length
    D = xpk_ref.shape[2]          # d_model
    H = num_heads
    hd = D // H
    TQ = xres_ref.shape[1]        # query tile rows

    # ---- once per batch element: project K / V for the whole sequence and
    #      cache them head-major in persistent VMEM scratch (reused for qi>0) --
    @pl.when(qi == 0)
    def _():
        k = jnp.dot(xpk_ref[0], wk_ref[...], preferred_element_type=f32)  # (N, D)
        v = jnp.dot(xv_ref[0], wv_ref[...], preferred_element_type=f32)   # (N, D)
        kb = k.astype(bf16)
        vb = v.astype(bf16)
        for h in range(H):                       # static lane slices, tiny copies
            lo = h * hd
            k_hm_ref[h] = kb[:, lo:lo + hd]      # (N, hd)
            v_hm_ref[h] = vb[:, lo:lo + hd]

    # ---- per query tile: Q projection (score scale folded into Wq on host) --
    row0 = pl.multiple_of(qi * TQ, TQ)
    xq = xpk_ref[0, pl.ds(row0, TQ), :]                                    # (TQ, D) bf16
    q = jnp.dot(xq, wq_ref[...], preferred_element_type=f32)              # (TQ, D) f32
    qb = q.astype(bf16)
    for h in range(H):
        lo = h * hd
        q_hm_ref[h] = qb[:, lo:lo + hd]                                    # (TQ, hd)

    # ---- per-head attention: fori_loop bounds the (TQ, N) temporaries to one
    #      head at a time (VMEM pressure / spills, critical on v7x) ----------
    def head_body(h, carry):
        qh = q_hm_ref[h]                                                   # (TQ, hd) bf16
        kh = k_hm_ref[h]                                                   # (N,  hd) bf16
        vh = v_hm_ref[h]                                                   # (N,  hd) bf16
        s = lax.dot_general(qh, kh, (((1,), (1,)), ((), ())),
                            preferred_element_type=f32)                    # (TQ, N) f32
        m = jnp.max(s, axis=-1, keepdims=True)
        p = jnp.exp((s - m).astype(exp_dtype))                             # bf16 exp on v6e/v7x
        denom = jnp.sum(p, axis=-1, keepdims=True, dtype=f32)
        o = jnp.dot(p.astype(bf16), vh, preferred_element_type=f32)        # (TQ, hd)
        # normalize the (TQ, hd) output instead of the (TQ, N) probabilities
        o_hm_ref[h] = o * pl.reciprocal(denom, approx=True)
        return carry

    lax.fori_loop(0, H, head_body, 0)

    # merge heads back to (TQ, D): one relayout per tile
    attn = jnp.concatenate([o_hm_ref[h] for h in range(H)], axis=-1)       # (TQ, D) f32

    # ---- residual + LayerNorm1 (f32) ----
    x1p = xres_ref[0].astype(f32) + attn
    mu1 = jnp.mean(x1p, axis=-1, keepdims=True)
    xc1 = x1p - mu1
    var1 = jnp.mean(xc1 * xc1, axis=-1, keepdims=True)
    x1 = xc1 * lax.rsqrt(var1 + eps) * ln1_w_ref[...] + ln1_b_ref[...]

    # ---- feed-forward (bf16 matmul operands, f32 accumulation) ----
    h1 = jnp.dot(x1.astype(bf16), w1_ref[...], preferred_element_type=f32) + b1_ref[...]
    h1 = jnp.maximum(h1, 0.0)
    y = jnp.dot(h1.astype(bf16), w2_ref[...], preferred_element_type=f32) + b2_ref[...]

    # ---- residual + LayerNorm2 (f32) ----
    x2p = x1 + y
    mu2 = jnp.mean(x2p, axis=-1, keepdims=True)
    xc2 = x2p - mu2
    var2 = jnp.mean(xc2 * xc2, axis=-1, keepdims=True)
    x2 = xc2 * lax.rsqrt(var2 + eps) * ln2_w_ref[...] + ln2_b_ref[...]

    out_ref[0] = x2.astype(out_ref.dtype)


def _ceil_to(x, m):
    return ((x + m - 1) // m) * m


def _estimate_vmem_bytes(N, D, F, H, block_q):
    """Rough upper bound on live VMEM: pipeline buffers + scratch + temporaries."""
    hd_pad = _ceil_to(D // H, 128)            # head-major scratch is lane-padded
    f32, bf16 = 4, 2
    # pipelined buffers: f32 x tile + output tile (double-buffered), two bf16
    # full-sequence streams (double-buffered), single-buffered weights/consts
    buf = 2 * 2 * block_q * D * f32
    buf += 2 * 2 * N * D * bf16
    buf += (3 * D * D + 2 * D * F) * bf16 + (2 * F + 6 * D) * f32
    # persistent scratch: head-major K/V + per-tile Q / per-head output
    scr = 2 * H * N * hd_pad * bf16 + H * block_q * hd_pad * (bf16 + f32)
    # in-kernel temporaries: K/V projection (qi==0), one head's scores/probs,
    # FFN activation, LayerNorm intermediates
    tmp = 2 * N * D * (f32 + bf16)
    tmp += 3 * block_q * N * f32
    tmp += 2 * block_q * F * f32
    tmp += 6 * block_q * D * f32
    return int(1.5 * (buf + scr + tmp)) + (4 << 20)


def _default_block_q(N):
    prefer = (128, 256)                        # 128: MXU-exact on v5e, VMEM-safe on v7x
    try:                                       # >=100 MiB VMEM (v6e/v5e): try 256 first
        if getattr(pltpu.get_tpu_info(), "vmem_capacity_bytes", 0) >= (100 << 20):
            prefer = (256, 128)
    except Exception:
        pass
    for cand in prefer:
        if N % cand == 0:
            return cand
    bq = 8
    while bq * 2 <= min(N, 512) and N % (bq * 2) == 0:
        bq *= 2
    return bq if N % bq == 0 else N


def transformer_encoder_layer(x, pos, params, *, num_heads, eps=1e-5,
                              block_q=None, vmem_limit_bytes=None,
                              softmax_exp_dtype=jnp.bfloat16):
    """Fused DETR TransformerEncoderLayer forward.

    softmax_exp_dtype: bf16 recommended on v6e/v7x (EUP throughput); pass
    jnp.float32 on v5e or when tighter accuracy is required.
    """
    B, N, D = x.shape
    F = params["w1t"].shape[1]
    assert D % num_heads == 0
    hd = D // num_heads

    if block_q is None:
        block_q = _default_block_q(N)
    assert N % block_q == 0, "sequence length must be divisible by block_q"
    n_q = N // block_q

    if vmem_limit_bytes is None:
        est = _estimate_vmem_bytes(N, D, F, num_heads, block_q)
        vmem_limit_bytes = min(max(est, 32 << 20), 64 << 20)   # also fits v7x VMEM

    bf16 = jnp.bfloat16
    # fold the sqrt(head_dim) score scale (torch: attn / head_dim**-0.5) into Wq
    wq = (params["wq_t"] * (float(hd) ** 0.5)).astype(bf16)
    wk = params["wk_t"].astype(bf16)
    wv = params["wv_t"].astype(bf16)
    w1 = params["w1t"].astype(bf16)
    w2 = params["w2t"].astype(bf16)
    # pre-add positional encoding once and stream bf16 (half the HBM bytes)
    xpk = (x + pos).astype(bf16)    # Q/K input, full sequence
    xv = x.astype(bf16)             # V input, full sequence

    kernel = functools.partial(encoder_layer_kernel, num_heads=num_heads,
                               eps=eps, exp_dtype=softmax_exp_dtype)

    def const_spec(shape):
        nd = len(shape)
        idx = lambda b, qi: (0,) * nd
        if hasattr(pl, "Buffered"):
            try:   # single-buffer grid-invariant constants (no double-buffering)
                return pl.BlockSpec(shape, idx, pipeline_mode=pl.Buffered(1))
            except TypeError:
                pass
        return pl.BlockSpec(shape, idx)

    q_tile = pl.BlockSpec((1, block_q, D), lambda b, qi: (b, qi, 0))
    full_seq = pl.BlockSpec((1, N, D), lambda b, qi: (b, 0, 0))   # fetched once per b

    return pl.pallas_call(
        kernel,
        out_shape=jax.ShapeDtypeStruct((B, N, D), x.dtype),
        grid=(B, n_q),
        in_specs=[
            q_tile,                              # x   (f32 query tile, residual)
            full_seq,                            # x+pos (bf16, Q tile slice + K)
            full_seq,                            # x     (bf16, V)
            const_spec((D, D)),                  # wq^T * sqrt(hd) (bf16)
            const_spec((D, D)),                  # wk^T (bf16)
            const_spec((D, D)),                  # wv^T (bf16)
            const_spec((1, D)), const_spec((1, D)),   # layernorm1 w, b
            const_spec((D, F)), const_spec((1, F)),   # linear1 w^T (bf16), bias
            const_spec((F, D)), const_spec((1, D)),   # linear2 w^T (bf16), bias
            const_spec((1, D)), const_spec((1, D)),   # layernorm2 w, b
        ],
        out_specs=q_tile,
        scratch_shapes=[
            pltpu.VMEM((num_heads, N, hd), bf16),            # K head-major (persistent)
            pltpu.VMEM((num_heads, N, hd), bf16),            # V head-major (persistent)
            pltpu.VMEM((num_heads, block_q, hd), bf16),      # Q head-major (per tile)
            pltpu.VMEM((num_heads, block_q, hd), jnp.float32),  # per-head attn out
        ],
        compiler_params=pltpu.CompilerParams(
            # qi must stay sequential per core so the K/V scratch remains valid;
            # the batch axis is sharded across cores (megacore / v7x 2-TC).
            dimension_semantics=("parallel", "arbitrary"),
            vmem_limit_bytes=vmem_limit_bytes,
        ),
    )(x, xpk, xv, wq, wk, wv,
      params["ln1_w"], params["ln1_b"], w1, params["b1"],
      w2, params["b2"], params["ln2_w"], params["ln2_b"])


def reference(x, pos, p, num_heads, eps=1e-5):
    """Pure-JAX f32 reference with identical semantics to the PyTorch module."""
    B, N, D = x.shape
    hd = D // num_heads
    qk = x + pos
    q = qk @ p["wq_t"]
    k = qk @ p["wk_t"]
    v = x @ p["wv_t"]

    def split(t):
        return t.reshape(B, N, num_heads, hd).transpose(0, 2, 1, 3)

    qh, kh, vh = split(q), split(k), split(v)
    attn = jnp.einsum("bhnd,bhmd->bhnm", qh, kh) / (hd ** -0.5)
    attn = jax.nn.softmax(attn, axis=-1)
    o = jnp.einsum("bhnm,bhmd->bhnd", attn, vh).transpose(0, 2, 1, 3).reshape(B, N, D)

    def ln(z, w, b):
        mu = z.mean(-1, keepdims=True)
        var = ((z - mu) ** 2).mean(-1, keepdims=True)
        return (z - mu) / jnp.sqrt(var + eps) * w + b

    x1 = ln(x + o, p["ln1_w"][0], p["ln1_b"][0])
    h = jax.nn.relu(x1 @ p["w1t"] + p["b1"][0])
    y = h @ p["w2t"] + p["b2"][0]
    return ln(x1 + y, p["ln2_w"][0], p["ln2_b"][0])


if __name__ == "__main__":
    # Small, module-consistent shapes; block_q=8 -> grid (B, 2) so the qi>0
    # path (reuse of the cached K/V scratch) is exercised.
    B, N, D = 2, 16, 32          # batch, seq, d_model
    H = 4                        # num_heads
    F = 64                       # ff_dim (2048 in the real module)
    TQ = 8                       # query tile -> 2 sequence tiles per batch element

    key = jax.random.PRNGKey(0)
    ks = jax.random.split(key, 10)

    x = jax.random.normal(ks[0], (B, N, D), dtype=jnp.float32)
    pos = jax.random.normal(ks[1], (B, N, D), dtype=jnp.float32)

    def init_w(k, shape, scale=0.05):
        return (scale * jax.random.normal(k, shape)).astype(jnp.float32)

    params = {
        "wq_t": init_w(ks[2], (D, D)),
        "wk_t": init_w(ks[3], (D, D)),
        "wv_t": init_w(ks[4], (D, D)),
        "ln1_w": jnp.ones((1, D), jnp.float32),
        "ln1_b": jnp.zeros((1, D), jnp.float32),
        "w1t": init_w(ks[5], (D, F)),
        "b1": init_w(ks[6], (1, F)),
        "w2t": init_w(ks[7], (F, D)),
        "b2": init_w(ks[8], (1, D)),
        "ln2_w": jnp.ones((1, D), jnp.float32),
        "ln2_b": jnp.zeros((1, D), jnp.float32),
    }

    out = transformer_encoder_layer(x, pos, params, num_heads=H, block_q=TQ)
    out = jax.block_until_ready(out)

    ref = reference(x, pos, params, num_heads=H)
    assert out.shape == (B, N, D)
    max_err = jnp.max(jnp.abs(out - ref))
    # bf16 matmul operands + bf16 softmax exponent (f32 accumulation / reductions)
    # against an f32 reference -> bf16-appropriate tolerance.
    assert jnp.allclose(out, ref, atol=4e-2, rtol=4e-2), f"max abs err {max_err}"

    print("KERNEL_OK")
</pallas_src>

<mosaic_0001>
module attributes {stable_mosaic.version = 11 : i64} {
  func.func @encoder_layer_kernel(%arg0: i32, %arg1: i32, %arg2: memref<1x8x32xf32, #tpu.memory_space<vmem>>, %arg3: memref<1x16x32xbf16, #tpu.memory_space<vmem>>, %arg4: memref<1x16x32xbf16, #tpu.memory_space<vmem>>, %arg5: memref<32x32xbf16, #tpu.memory_space<vmem>>, %arg6: memref<32x32xbf16, #tpu.memory_space<vmem>>, %arg7: memref<32x32xbf16, #tpu.memory_space<vmem>>, %arg8: memref<1x32xf32, #tpu.memory_space<vmem>>, %arg9: memref<1x32xf32, #tpu.memory_space<vmem>>, %arg10: memref<32x64xbf16, #tpu.memory_space<vmem>>, %arg11: memref<1x64xf32, #tpu.memory_space<vmem>>, %arg12: memref<64x32xbf16, #tpu.memory_space<vmem>>, %arg13: memref<1x32xf32, #tpu.memory_space<vmem>>, %arg14: memref<1x32xf32, #tpu.memory_space<vmem>>, %arg15: memref<1x32xf32, #tpu.memory_space<vmem>>, %arg16: memref<1x8x32xf32, #tpu.memory_space<vmem>>, %arg17: memref<4x16x8xbf16, #tpu.memory_space<vmem>>, %arg18: memref<4x16x8xbf16, #tpu.memory_space<vmem>>, %arg19: memref<4x8x8xbf16, #tpu.memory_space<vmem>>, %arg20: memref<4x8x8xf32, #tpu.memory_space<vmem>>) attributes {dimension_semantics = [#tpu.dimension_semantics<parallel>, #tpu.dimension_semantics<arbitrary>], iteration_bounds = array<i64: 2, 2>, scalar_prefetch = 0 : i64, scratch_operands = 4 : i64, tpu.core_type = #tpu.core_type<tc>, window_params = [{transform_indices = @transform_0, window_bounds = array<i64: 1, 8, 32>}, {transform_indices = @transform_1, window_bounds = array<i64: 1, 16, 32>}, {transform_indices = @transform_2, window_bounds = array<i64: 1, 16, 32>}, {pipeline_mode = #tpu.pipeline_mode<synchronous>, transform_indices = @transform_3, window_bounds = array<i64: 32, 32>}, {pipeline_mode = #tpu.pipeline_mode<synchronous>, transform_indices = @transform_4, window_bounds = array<i64: 32, 32>}, {pipeline_mode = #tpu.pipeline_mode<synchronous>, transform_indices = @transform_5, window_bounds = array<i64: 32, 32>}, {pipeline_mode = #tpu.pipeline_mode<synchronous>, transform_indices = @transform_6, window_bounds = array<i64: 1, 32>}, {pipeline_mode = #tpu.pipeline_mode<synchronous>, transform_indices = @transform_7, window_bounds = array<i64: 1, 32>}, {pipeline_mode = #tpu.pipeline_mode<synchronous>, transform_indices = @transform_8, window_bounds = array<i64: 32, 64>}, {pipeline_mode = #tpu.pipeline_mode<synchronous>, transform_indices = @transform_9, window_bounds = array<i64: 1, 64>}, {pipeline_mode = #tpu.pipeline_mode<synchronous>, transform_indices = @transform_10, window_bounds = array<i64: 64, 32>}, {pipeline_mode = #tpu.pipeline_mode<synchronous>, transform_indices = @transform_11, window_bounds = array<i64: 1, 32>}, {pipeline_mode = #tpu.pipeline_mode<synchronous>, transform_indices = @transform_12, window_bounds = array<i64: 1, 32>}, {pipeline_mode = #tpu.pipeline_mode<synchronous>, transform_indices = @transform_13, window_bounds = array<i64: 1, 32>}, {transform_indices = @transform_14, window_bounds = array<i64: 1, 8, 32>}]} {
    %c0_i32 = arith.constant 0 : i32
    %0 = arith.cmpi eq, %arg1, %c0_i32 : i32
    %1 = arith.extui %0 : i1 to i32
    %c0_i32_0 = arith.constant 0 : i32
    %2 = arith.cmpi ne, %1, %c0_i32_0 : i32
    scf.if %2 {
      %c0_62 = arith.constant 0 : index
      %c0_63 = arith.constant 0 : index
      %c0_64 = arith.constant 0 : index
      %102 = vector.load %arg3[%c0_62, %c0_63, %c0_64] : memref<1x16x32xbf16, #tpu.memory_space<vmem>>, vector<1x16x32xbf16>
      %103 = vector.shape_cast %102 : vector<1x16x32xbf16> to vector<16x32xbf16>
      %c0_65 = arith.constant 0 : index
      %c0_66 = arith.constant 0 : index
      %104 = vector.load %arg6[%c0_65, %c0_66] : memref<32x32xbf16, #tpu.memory_space<vmem>>, vector<32x32xbf16>
      %cst_67 = arith.constant dense<0.000000e+00> : vector<16x32xf32>
      %105 = tpu.matmul %103, %104, %cst_67 {dimension_numbers = #tpu.dot_dimension_numbers<[1], [0], [0], [1], [0, 0, 1, 1], [], []>} : vector<16x32xbf16>, vector<32x32xbf16>, vector<16x32xf32> -> vector<16x32xf32>
      %c0_68 = arith.constant 0 : index
      %c0_69 = arith.constant 0 : index
      %c0_70 = arith.constant 0 : index
      %106 = vector.load %arg4[%c0_68, %c0_69, %c0_70] : memref<1x16x32xbf16, #tpu.memory_space<vmem>>, vector<1x16x32xbf16>
      %107 = vector.shape_cast %106 : vector<1x16x32xbf16> to vector<16x32xbf16>
      %c0_71 = arith.constant 0 : index
      %c0_72 = arith.constant 0 : index
      %108 = vector.load %arg7[%c0_71, %c0_72] : memref<32x32xbf16, #tpu.memory_space<vmem>>, vector<32x32xbf16>
      %cst_73 = arith.constant dense<0.000000e+00> : vector<16x32xf32>
      %109 = tpu.matmul %107, %108, %cst_73 {dimension_numbers = #tpu.dot_dimension_numbers<[1], [0], [0], [1], [0, 0, 1, 1], [], []>} : vector<16x32xbf16>, vector<32x32xbf16>, vector<16x32xf32> -> vector<16x32xf32>
      %110 = arith.truncf %105 : vector<16x32xf32> to vector<16x32xbf16>
      %111 = arith.truncf %109 : vector<16x32xf32> to vector<16x32xbf16>
      %112 = vector.extract_strided_slice %110 {offsets = [0, 0], sizes = [16, 8], strides = [1, 1]} : vector<16x32xbf16> to vector<16x8xbf16>
      %c0_74 = arith.constant 0 : index
      %c0_75 = arith.constant 0 : index
      %c0_76 = arith.constant 0 : index
      %113 = vector.load %arg17[%c0_74, %c0_75, %c0_76] : memref<4x16x8xbf16, #tpu.memory_space<vmem>>, vector<1x16x8xbf16>
      %114 = vector.shape_cast %113 : vector<1x16x8xbf16> to vector<16x8xbf16>
      %115 = vector.shape_cast %112 : vector<16x8xbf16> to vector<1x16x8xbf16>
      tpu.vector_store %arg17[%c0_74, %c0_75, %c0_76], %115 {strides = array<i32>} : memref<4x16x8xbf16, #tpu.memory_space<vmem>>, vector<1x16x8xbf16>,
      %116 = vector.extract_strided_slice %111 {offsets = [0, 0], sizes = [16, 8], strides = [1, 1]} : vector<16x32xbf16> to vector<16x8xbf16>
      %c0_77 = arith.constant 0 : index
      %c0_78 = arith.constant 0 : index
      %c0_79 = arith.constant 0 : index
      %117 = vector.load %arg18[%c0_77, %c0_78, %c0_79] : memref<4x16x8xbf16, #tpu.memory_space<vmem>>, vector<1x16x8xbf16>
      %118 = vector.shape_cast %117 : vector<1x16x8xbf16> to vector<16x8xbf16>
      %119 = vector.shape_cast %116 : vector<16x8xbf16> to vector<1x16x8xbf16>
      tpu.vector_store %arg18[%c0_77, %c0_78, %c0_79], %119 {strides = array<i32>} : memref<4x16x8xbf16, #tpu.memory_space<vmem>>, vector<1x16x8xbf16>,
      %120 = vector.extract_strided_slice %110 {offsets = [0, 8], sizes = [16, 8], strides = [1, 1]} : vector<16x32xbf16> to vector<16x8xbf16>
      %c1_80 = arith.constant 1 : index
      %c0_81 = arith.constant 0 : index
      %c0_82 = arith.constant 0 : index
      %121 = vector.load %arg17[%c1_80, %c0_81, %c0_82] : memref<4x16x8xbf16, #tpu.memory_space<vmem>>, vector<1x16x8xbf16>
      %122 = vector.shape_cast %121 : vector<1x16x8xbf16> to vector<16x8xbf16>
      %123 = vector.shape_cast %120 : vector<16x8xbf16> to vector<1x16x8xbf16>
      tpu.vector_store %arg17[%c1_80, %c0_81, %c0_82], %123 {strides = array<i32>} : memref<4x16x8xbf16, #tpu.memory_space<vmem>>, vector<1x16x8xbf16>,
      %124 = vector.extract_strided_slice %111 {offsets = [0, 8], sizes = [16, 8], strides = [1, 1]} : vector<16x32xbf16> to vector<16x8xbf16>
      %c1_83 = arith.constant 1 : index
      %c0_84 = arith.constant 0 : index
      %c0_85 = arith.constant 0 : index
      %125 = vector.load %arg18[%c1_83, %c0_84, %c0_85] : memref<4x16x8xbf16, #tpu.memory_space<vmem>>, vector<1x16x8xbf16>
      %126 = vector.shape_cast %125 : vector<1x16x8xbf16> to vector<16x8xbf16>
      %127 = vector.shape_cast %124 : vector<16x8xbf16> to vector<1x16x8xbf16>
      tpu.vector_store %arg18[%c1_83, %c0_84, %c0_85], %127 {strides = array<i32>} : memref<4x16x8xbf16, #tpu.memory_space<vmem>>, vector<1x16x8xbf16>,
      %128 = vector.extract_strided_slice %110 {offsets = [0, 16], sizes = [16, 8], strides = [1, 1]} : vector<16x32xbf16> to vector<16x8xbf16>
      %c2_86 = arith.constant 2 : index
      %c0_87 = arith.constant 0 : index
      %c0_88 = arith.constant 0 : index
      %129 = vector.load %arg17[%c2_86, %c0_87, %c0_88] : memref<4x16x8xbf16, #tpu.memory_space<vmem>>, vector<1x16x8xbf16>
      %130 = vector.shape_cast %129 : vector<1x16x8xbf16> to vector<16x8xbf16>
      %131 = vector.shape_cast %128 : vector<16x8xbf16> to vector<1x16x8xbf16>
      tpu.vector_store %arg17[%c2_86, %c0_87, %c0_88], %131 {strides = array<i32>} : memref<4x16x8xbf16, #tpu.memory_space<vmem>>, vector<1x16x8xbf16>,
      %132 = vector.extract_strided_slice %111 {offsets = [0, 16], sizes = [16, 8], strides = [1, 1]} : vector<16x32xbf16> to vector<16x8xbf16>
      %c2_89 = arith.constant 2 : index
      %c0_90 = arith.constant 0 : index
      %c0_91 = arith.constant 0 : index
      %133 = vector.load %arg18[%c2_89, %c0_90, %c0_91] : memref<4x16x8xbf16, #tpu.memory_space<vmem>>, vector<1x16x8xbf16>
      %134 = vector.shape_cast %133 : vector<1x16x8xbf16> to vector<16x8xbf16>
      %135 = vector.shape_cast %132 : vector<16x8xbf16> to vector<1x16x8xbf16>
      tpu.vector_store %arg18[%c2_89, %c0_90, %c0_91], %135 {strides = array<i32>} : memref<4x16x8xbf16, #tpu.memory_space<vmem>>, vector<1x16x8xbf16>,
      %136 = vector.extract_strided_slice %110 {offsets = [0, 24], sizes = [16, 8], strides = [1, 1]} : vector<16x32xbf16> to vector<16x8xbf16>
      %c3_92 = arith.constant 3 : index
      %c0_93 = arith.constant 0 : index
      %c0_94 = arith.constant 0 : index
      %137 = vector.load %arg17[%c3_92, %c0_93, %c0_94] : memref<4x16x8xbf16, #tpu.memory_space<vmem>>, vector<1x16x8xbf16>
      %138 = vector.shape_cast %137 : vector<1x16x8xbf16> to vector<16x8xbf16>
      %139 = vector.shape_cast %136 : vector<16x8xbf16> to vector<1x16x8xbf16>
      tpu.vector_store %arg17[%c3_92, %c0_93, %c0_94], %139 {strides = array<i32>} : memref<4x16x8xbf16, #tpu.memory_space<vmem>>, vector<1x16x8xbf16>,
      %140 = vector.extract_strided_slice %111 {offsets = [0, 24], sizes = [16, 8], strides = [1, 1]} : vector<16x32xbf16> to vector<16x8xbf16>
      %c3_95 = arith.constant 3 : index
      %c0_96 = arith.constant 0 : index
      %c0_97 = arith.constant 0 : index
      %141 = vector.load %arg18[%c3_95, %c0_96, %c0_97] : memref<4x16x8xbf16, #tpu.memory_space<vmem>>, vector<1x16x8xbf16>
      %142 = vector.shape_cast %141 : vector<1x16x8xbf16> to vector<16x8xbf16>
      %143 = vector.shape_cast %140 : vector<16x8xbf16> to vector<1x16x8xbf16>
      tpu.vector_store %arg18[%c3_95, %c0_96, %c0_97], %143 {strides = array<i32>} : memref<4x16x8xbf16, #tpu.memory_space<vmem>>, vector<1x16x8xbf16>,
    } else {
    }
    %c8_i32 = arith.constant 8 : i32
    %3 = arith.muli %arg1, %c8_i32 : i32
    %4 = tpu.assume_multiple %3, 8 : i32
    %c0 = arith.constant 0 : index
    %5 = arith.index_cast %4 : i32 to index
    %c0_1 = arith.constant 0 : index
    %6 = vector.load %arg3[%c0, %5, %c0_1] : memref<1x16x32xbf16, #tpu.memory_space<vmem>>, vector<1x8x32xbf16>
    %7 = vector.shape_cast %6 : vector<1x8x32xbf16> to vector<8x32xbf16>
    %c0_2 = arith.constant 0 : index
    %c0_3 = arith.constant 0 : index
    %8 = vector.load %arg5[%c0_2, %c0_3] : memref<32x32xbf16, #tpu.memory_space<vmem>>, vector<32x32xbf16>
    %cst = arith.constant dense<0.000000e+00> : vector<8x32xf32>
    %9 = tpu.matmul %7, %8, %cst {dimension_numbers = #tpu.dot_dimension_numbers<[1], [0], [0], [1], [0, 0, 1, 1], [], []>} : vector<8x32xbf16>, vector<32x32xbf16>, vector<8x32xf32> -> vector<8x32xf32>
    %10 = arith.truncf %9 : vector<8x32xf32> to vector<8x32xbf16>
    %11 = vector.extract_strided_slice %10 {offsets = [0, 0], sizes = [8, 8], strides = [1, 1]} : vector<8x32xbf16> to vector<8x8xbf16>
    %c0_4 = arith.constant 0 : index
    %c0_5 = arith.constant 0 : index
    %c0_6 = arith.constant 0 : index
    %12 = vector.load %arg19[%c0_4, %c0_5, %c0_6] : memref<4x8x8xbf16, #tpu.memory_space<vmem>>, vector<1x8x8xbf16>
    %13 = vector.shape_cast %12 : vector<1x8x8xbf16> to vector<8x8xbf16>
    %14 = vector.shape_cast %11 : vector<8x8xbf16> to vector<1x8x8xbf16>
    tpu.vector_store %arg19[%c0_4, %c0_5, %c0_6], %14 {strides = array<i32>} : memref<4x8x8xbf16, #tpu.memory_space<vmem>>, vector<1x8x8xbf16>,
    %15 = vector.extract_strided_slice %10 {offsets = [0, 8], sizes = [8, 8], strides = [1, 1]} : vector<8x32xbf16> to vector<8x8xbf16>
    %c1 = arith.constant 1 : index
    %c0_7 = arith.constant 0 : index
    %c0_8 = arith.constant 0 : index
    %16 = vector.load %arg19[%c1, %c0_7, %c0_8] : memref<4x8x8xbf16, #tpu.memory_space<vmem>>, vector<1x8x8xbf16>
    %17 = vector.shape_cast %16 : vector<1x8x8xbf16> to vector<8x8xbf16>
    %18 = vector.shape_cast %15 : vector<8x8xbf16> to vector<1x8x8xbf16>
    tpu.vector_store %arg19[%c1, %c0_7, %c0_8], %18 {strides = array<i32>} : memref<4x8x8xbf16, #tpu.memory_space<vmem>>, vector<1x8x8xbf16>,
    %19 = vector.extract_strided_slice %10 {offsets = [0, 16], sizes = [8, 8], strides = [1, 1]} : vector<8x32xbf16> to vector<8x8xbf16>
    %c2 = arith.constant 2 : index
    %c0_9 = arith.constant 0 : index
    %c0_10 = arith.constant 0 : index
    %20 = vector.load %arg19[%c2, %c0_9, %c0_10] : memref<4x8x8xbf16, #tpu.memory_space<vmem>>, vector<1x8x8xbf16>
    %21 = vector.shape_cast %20 : vector<1x8x8xbf16> to vector<8x8xbf16>
    %22 = vector.shape_cast %19 : vector<8x8xbf16> to vector<1x8x8xbf16>
    tpu.vector_store %arg19[%c2, %c0_9, %c0_10], %22 {strides = array<i32>} : memref<4x8x8xbf16, #tpu.memory_space<vmem>>, vector<1x8x8xbf16>,
    %23 = vector.extract_strided_slice %10 {offsets = [0, 24], sizes = [8, 8], strides = [1, 1]} : vector<8x32xbf16> to vector<8x8xbf16>
    %c3 = arith.constant 3 : index
    %c0_11 = arith.constant 0 : index
    %c0_12 = arith.constant 0 : index
    %24 = vector.load %arg19[%c3, %c0_11, %c0_12] : memref<4x8x8xbf16, #tpu.memory_space<vmem>>, vector<1x8x8xbf16>
    %25 = vector.shape_cast %24 : vector<1x8x8xbf16> to vector<8x8xbf16>
    %26 = vector.shape_cast %23 : vector<8x8xbf16> to vector<1x8x8xbf16>
    tpu.vector_store %arg19[%c3, %c0_11, %c0_12], %26 {strides = array<i32>} : memref<4x8x8xbf16, #tpu.memory_space<vmem>>, vector<1x8x8xbf16>,
    %c0_i32_13 = arith.constant 0 : i32
    %c4_i32 = arith.constant 4 : i32
    %27 = arith.addi %c0_i32_13, %c4_i32 : i32
    %c1_i32 = arith.constant 1 : i32
    scf.for %arg21 = %c0_i32_13 to %27 step %c1_i32  : i32 {
      %102 = arith.index_cast %arg21 : i32 to index
      %c0_62 = arith.constant 0 : index
      %c0_63 = arith.constant 0 : index
      %103 = vector.load %arg19[%102, %c0_62, %c0_63] : memref<4x8x8xbf16, #tpu.memory_space<vmem>>, vector<1x8x8xbf16>
      %104 = vector.shape_cast %103 : vector<1x8x8xbf16> to vector<8x8xbf16>
      %105 = arith.index_cast %arg21 : i32 to index
      %c0_64 = arith.constant 0 : index
      %c0_65 = arith.constant 0 : index
      %106 = vector.load %arg17[%105, %c0_64, %c0_65] : memref<4x16x8xbf16, #tpu.memory_space<vmem>>, vector<1x16x8xbf16>
      %107 = vector.shape_cast %106 : vector<1x16x8xbf16> to vector<16x8xbf16>
      %108 = arith.index_cast %arg21 : i32 to index
      %c0_66 = arith.constant 0 : index
      %c0_67 = arith.constant 0 : index
      %109 = vector.load %arg18[%108, %c0_66, %c0_67] : memref<4x16x8xbf16, #tpu.memory_space<vmem>>, vector<1x16x8xbf16>
      %110 = vector.shape_cast %109 : vector<1x16x8xbf16> to vector<16x8xbf16>
      %cst_68 = arith.constant dense<0.000000e+00> : vector<8x16xf32>
      %111 = tpu.matmul %104, %107, %cst_68 {dimension_numbers = #tpu.dot_dimension_numbers<[1], [1], [0], [0], [0, 0, 1, 0], [], []>} : vector<8x8xbf16>, vector<16x8xbf16>, vector<8x16xf32> -> vector<8x16xf32>
      %cst_69 = arith.constant dense<0xFF800000> : vector<8xf32>
      %112 = vector.multi_reduction <maximumf>, %111, %cst_69 [1] : vector<8x16xf32> to vector<8xf32>
      %113 = vector.shape_cast %112 : vector<8xf32> to vector<8x1xf32>
      %114 = vector.broadcast %113 : vector<8x1xf32> to vector<8x16xf32>
      %115 = arith.subf %111, %114 : vector<8x16xf32>
      %116 = arith.truncf %115 : vector<8x16xf32> to vector<8x16xbf16>
      %117 = math.exp %116 : vector<8x16xbf16>
      %118 = arith.extf %117 : vector<8x16xbf16> to vector<8x16xf32>
      %cst_70 = arith.constant dense<0.000000e+00> : vector<8xf32>
      %119 = vector.multi_reduction <add>, %118, %cst_70 [1] : vector<8x16xf32> to vector<8xf32>
      %120 = vector.shape_cast %119 : vector<8xf32> to vector<8x1xf32>
      %cst_71 = arith.constant dense<0.000000e+00> : vector<8x8xf32>
      %121 = tpu.matmul %117, %110, %cst_71 {dimension_numbers = #tpu.dot_dimension_numbers<[1], [0], [0], [1], [0, 0, 1, 1], [], []>} : vector<8x16xbf16>, vector<16x8xbf16>, vector<8x8xf32> -> vector<8x8xf32>
      %122 = tpu.reciprocal %120 {approx = true} : vector<8x1xf32> -> vector<8x1xf32>
      %123 = vector.broadcast %122 : vector<8x1xf32> to vector<8x8xf32>
      %124 = arith.mulf %121, %123 : vector<8x8xf32>
      %125 = arith.index_cast %arg21 : i32 to index
      %c0_72 = arith.constant 0 : index
      %c0_73 = arith.constant 0 : index
      %126 = vector.load %arg20[%125, %c0_72, %c0_73] : memref<4x8x8xf32, #tpu.memory_space<vmem>>, vector<1x8x8xf32>
      %127 = vector.shape_cast %126 : vector<1x8x8xf32> to vector<8x8xf32>
      %128 = vector.shape_cast %124 : vector<8x8xf32> to vector<1x8x8xf32>
      tpu.vector_store %arg20[%125, %c0_72, %c0_73], %128 {strides = array<i32>} : memref<4x8x8xf32, #tpu.memory_space<vmem>>, vector<1x8x8xf32>,
    }
    %c4_i32_14 = arith.constant 4 : i32
    %c0_15 = arith.constant 0 : index
    %c0_16 = arith.constant 0 : index
    %c0_17 = arith.constant 0 : index
    %28 = vector.load %arg20[%c0_15, %c0_16, %c0_17] : memref<4x8x8xf32, #tpu.memory_space<vmem>>, vector<1x8x8xf32>
    %29 = vector.shape_cast %28 : vector<1x8x8xf32> to vector<8x8xf32>
    %c1_18 = arith.constant 1 : index
    %c0_19 = arith.constant 0 : index
    %c0_20 = arith.constant 0 : index
    %30 = vector.load %arg20[%c1_18, %c0_19, %c0_20] : memref<4x8x8xf32, #tpu.memory_space<vmem>>, vector<1x8x8xf32>
    %31 = vector.shape_cast %30 : vector<1x8x8xf32> to vector<8x8xf32>
    %c2_21 = arith.constant 2 : index
    %c0_22 = arith.constant 0 : index
    %c0_23 = arith.constant 0 : index
    %32 = vector.load %arg20[%c2_21, %c0_22, %c0_23] : memref<4x8x8xf32, #tpu.memory_space<vmem>>, vector<1x8x8xf32>
    %33 = vector.shape_cast %32 : vector<1x8x8xf32> to vector<8x8xf32>
    %c3_24 = arith.constant 3 : index
    %c0_25 = arith.constant 0 : index
    %c0_26 = arith.constant 0 : index
    %34 = vector.load %arg20[%c3_24, %c0_25, %c0_26] : memref<4x8x8xf32, #tpu.memory_space<vmem>>, vector<1x8x8xf32>
    %35 = vector.shape_cast %34 : vector<1x8x8xf32> to vector<8x8xf32>
    %36 = tpu.concatenate %29, %31, %33, %35 in 1 : vector<8x8xf32>, vector<8x8xf32>, vector<8x8xf32>, vector<8x8xf32> -> vector<8x32xf32>
    %c0_27 = arith.constant 0 : index
    %c0_28 = arith.constant 0 : index
    %c0_29 = arith.constant 0 : index
    %37 = vector.load %arg2[%c0_27, %c0_28, %c0_29] : memref<1x8x32xf32, #tpu.memory_space<vmem>>, vector<1x8x32xf32>
    %38 = vector.shape_cast %37 : vector<1x8x32xf32> to vector<8x32xf32>
    %39 = arith.addf %38, %36 : vector<8x32xf32>
    %cst_30 = arith.constant dense<0.000000e+00> : vector<8xf32>
    %40 = vector.multi_reduction <add>, %39, %cst_30 [1] : vector<8x32xf32> to vector<8xf32>
    %41 = vector.shape_cast %40 : vector<8xf32> to vector<8x1xf32>
    %cst_31 = arith.constant 3.200000e+01 : f32
    %42 = vector.broadcast %cst_31 : f32 to vector<8x1xf32>
    %43 = arith.divf %41, %42 : vector<8x1xf32>
    %44 = vector.broadcast %43 : vector<8x1xf32> to vector<8x32xf32>
    %45 = arith.subf %39, %44 : vector<8x32xf32>
    %46 = arith.mulf %45, %45 : vector<8x32xf32>
    %cst_32 = arith.constant dense<0.000000e+00> : vector<8xf32>
    %47 = vector.multi_reduction <add>, %46, %cst_32 [1] : vector<8x32xf32> to vector<8xf32>
    %48 = vector.shape_cast %47 : vector<8xf32> to vector<8x1xf32>
    %cst_33 = arith.constant 3.200000e+01 : f32
    %49 = vector.broadcast %cst_33 : f32 to vector<8x1xf32>
    %50 = arith.divf %48, %49 : vector<8x1xf32>
    %cst_34 = arith.constant 9.99999974E-6 : f32
    %51 = vector.broadcast %cst_34 : f32 to vector<8x1xf32>
    %52 = arith.addf %50, %51 : vector<8x1xf32>
    %53 = math.rsqrt %52 : vector<8x1xf32>
    %54 = vector.broadcast %53 : vector<8x1xf32> to vector<8x32xf32>
    %55 = arith.mulf %45, %54 : vector<8x32xf32>
    %c0_35 = arith.constant 0 : index
    %c0_36 = arith.constant 0 : index
    %56 = vector.load %arg8[%c0_35, %c0_36] : memref<1x32xf32, #tpu.memory_space<vmem>>, vector<1x32xf32>
    %57 = vector.broadcast %56 : vector<1x32xf32> to vector<8x32xf32>
    %58 = arith.mulf %55, %57 : vector<8x32xf32>
    %c0_37 = arith.constant 0 : index
    %c0_38 = arith.constant 0 : index
    %59 = vector.load %arg9[%c0_37, %c0_38] : memref<1x32xf32, #tpu.memory_space<vmem>>, vector<1x32xf32>
    %60 = vector.broadcast %59 : vector<1x32xf32> to vector<8x32xf32>
    %61 = arith.addf %58, %60 : vector<8x32xf32>
    %62 = arith.truncf %61 : vector<8x32xf32> to vector<8x32xbf16>
    %c0_39 = arith.constant 0 : index
    %c0_40 = arith.constant 0 : index
    %63 = vector.load %arg10[%c0_39, %c0_40] : memref<32x64xbf16, #tpu.memory_space<vmem>>, vector<32x64xbf16>
    %cst_41 = arith.constant dense<0.000000e+00> : vector<8x64xf32>
    %64 = tpu.matmul %62, %63, %cst_41 {dimension_numbers = #tpu.dot_dimension_numbers<[1], [0], [0], [1], [0, 0, 1, 1], [], []>} : vector<8x32xbf16>, vector<32x64xbf16>, vector<8x64xf32> -> vector<8x64xf32>
    %c0_42 = arith.constant 0 : index
    %c0_43 = arith.constant 0 : index
    %65 = vector.load %arg11[%c0_42, %c0_43] : memref<1x64xf32, #tpu.memory_space<vmem>>, vector<1x64xf32>
    %66 = vector.broadcast %65 : vector<1x64xf32> to vector<8x64xf32>
    %67 = arith.addf %64, %66 : vector<8x64xf32>
    %cst_44 = arith.constant 0.000000e+00 : f32
    %68 = vector.broadcast %cst_44 : f32 to vector<8x64xf32>
    %69 = arith.maximumf %67, %68 : vector<8x64xf32>
    %70 = arith.truncf %69 : vector<8x64xf32> to vector<8x64xbf16>
    %c0_45 = arith.constant 0 : index
    %c0_46 = arith.constant 0 : index
    %71 = vector.load %arg12[%c0_45, %c0_46] : memref<64x32xbf16, #tpu.memory_space<vmem>>, vector<64x32xbf16>
    %cst_47 = arith.constant dense<0.000000e+00> : vector<8x32xf32>
    %72 = tpu.matmul %70, %71, %cst_47 {dimension_numbers = #tpu.dot_dimension_numbers<[1], [0], [0], [1], [0, 0, 1, 1], [], []>} : vector<8x64xbf16>, vector<64x32xbf16>, vector<8x32xf32> -> vector<8x32xf32>
    %c0_48 = arith.constant 0 : index
    %c0_49 = arith.constant 0 : index
    %73 = vector.load %arg13[%c0_48, %c0_49] : memref<1x32xf32, #tpu.memory_space<vmem>>, vector<1x32xf32>
    %74 = vector.broadcast %73 : vector<1x32xf32> to vector<8x32xf32>
    %75 = arith.addf %72, %74 : vector<8x32xf32>
    %76 = arith.addf %61, %75 : vector<8x32xf32>
    %cst_50 = arith.constant dense<0.000000e+00> : vector<8xf32>
    %77 = vector.multi_reduction <add>, %76, %cst_50 [1] : vector<8x32xf32> to vector<8xf32>
    %78 = vector.shape_cast %77 : vector<8xf32> to vector<8x1xf32>
    %cst_51 = arith.constant 3.200000e+01 : f32
    %79 = vector.broadcast %cst_51 : f32 to vector<8x1xf32>
    %80 = arith.divf %78, %79 : vector<8x1xf32>
    %81 = vector.broadcast %80 : vector<8x1xf32> to vector<8x32xf32>
    %82 = arith.subf %76, %81 : vector<8x32xf32>
    %83 = arith.mulf %82, %82 : vector<8x32xf32>
    %cst_52 = arith.constant dense<0.000000e+00> : vector<8xf32>
    %84 = vector.multi_reduction <add>, %83, %cst_52 [1] : vector<8x32xf32> to vector<8xf32>
    %85 = vector.shape_cast %84 : vector<8xf32> to vector<8x1xf32>
    %cst_53 = arith.constant 3.200000e+01 : f32
    %86 = vector.broadcast %cst_53 : f32 to vector<8x1xf32>
    %87 = arith.divf %85, %86 : vector<8x1xf32>
    %cst_54 = arith.constant 9.99999974E-6 : f32
    %88 = vector.broadcast %cst_54 : f32 to vector<8x1xf32>
    %89 = arith.addf %87, %88 : vector<8x1xf32>
    %90 = math.rsqrt %89 : vector<8x1xf32>
    %91 = vector.broadcast %90 : vector<8x1xf32> to vector<8x32xf32>
    %92 = arith.mulf %82, %91 : vector<8x32xf32>
    %c0_55 = arith.constant 0 : index
    %c0_56 = arith.constant 0 : index
    %93 = vector.load %arg14[%c0_55, %c0_56] : memref<1x32xf32, #tpu.memory_space<vmem>>, vector<1x32xf32>
    %94 = vector.broadcast %93 : vector<1x32xf32> to vector<8x32xf32>
    %95 = arith.mulf %92, %94 : vector<8x32xf32>
    %c0_57 = arith.constant 0 : index
    %c0_58 = arith.constant 0 : index
    %96 = vector.load %arg15[%c0_57, %c0_58] : memref<1x32xf32, #tpu.memory_space<vmem>>, vector<1x32xf32>
    %97 = vector.broadcast %96 : vector<1x32xf32> to vector<8x32xf32>
    %98 = arith.addf %95, %97 : vector<8x32xf32>
    %c0_59 = arith.constant 0 : index
    %c0_60 = arith.constant 0 : index
    %c0_61 = arith.constant 0 : index
    %99 = vector.load %arg16[%c0_59, %c0_60, %c0_61] : memref<1x8x32xf32, #tpu.memory_space<vmem>>, vector<1x8x32xf32>
    %100 = vector.shape_cast %99 : vector<1x8x32xf32> to vector<8x32xf32>
    %101 = vector.shape_cast %98 : vector<8x32xf32> to vector<1x8x32xf32>
    tpu.vector_store %arg16[%c0_59, %c0_60, %c0_61], %101 {strides = array<i32>} : memref<1x8x32xf32, #tpu.memory_space<vmem>>, vector<1x8x32xf32>,
    return
  }
  func.func @transform_0(%arg0: i32, %arg1: i32) -> (i32, i32, i32) {
    %c0_i32 = arith.constant 0 : i32
    %c0_i32_0 = arith.constant 0 : i32
    return %arg0, %arg1, %c0_i32 : i32, i32, i32
  }
  func.func @transform_1(%arg0: i32, %arg1: i32) -> (i32, i32, i32) {
    %c0_i32 = arith.constant 0 : i32
    %c0_i32_0 = arith.constant 0 : i32
    %c0_i32_1 = arith.constant 0 : i32
    return %arg0, %c0_i32, %c0_i32_0 : i32, i32, i32
  }
  func.func @transform_2(%arg0: i32, %arg1: i32) -> (i32, i32, i32) {
    %c0_i32 = arith.constant 0 : i32
    %c0_i32_0 = arith.constant 0 : i32
    %c0_i32_1 = arith.constant 0 : i32
    return %arg0, %c0_i32, %c0_i32_0 : i32, i32, i32
  }
  func.func @transform_3(%arg0: i32, %arg1: i32) -> (i32, i32) {
    %c0_i32 = arith.constant 0 : i32
    %c0_i32_0 = arith.constant 0 : i32
    %c0_i32_1 = arith.constant 0 : i32
    return %c0_i32, %c0_i32_0 : i32, i32
  }
  func.func @transform_4(%arg0: i32, %arg1: i32) -> (i32, i32) {
    %c0_i32 = arith.constant 0 : i32
    %c0_i32_0 = arith.constant 0 : i32
    %c0_i32_1 = arith.constant 0 : i32
    return %c0_i32, %c0_i32_0 : i32, i32
  }
  func.func @transform_5(%arg0: i32, %arg1: i32) -> (i32, i32) {
    %c0_i32 = arith.constant 0 : i32
    %c0_i32_0 = arith.constant 0 : i32
    %c0_i32_1 = arith.constant 0 : i32
    return %c0_i32, %c0_i32_0 : i32, i32
  }
  func.func @transform_6(%arg0: i32, %arg1: i32) -> (i32, i32) {
    %c0_i32 = arith.constant 0 : i32
    %c0_i32_0 = arith.constant 0 : i32
    %c0_i32_1 = arith.constant 0 : i32
    return %c0_i32, %c0_i32_0 : i32, i32
  }
  func.func @transform_7(%arg0: i32, %arg1: i32) -> (i32, i32) {
    %c0_i32 = arith.constant 0 : i32
    %c0_i32_0 = arith.constant 0 : i32
    %c0_i32_1 = arith.constant 0 : i32
    return %c0_i32, %c0_i32_0 : i32, i32
  }
  func.func @transform_8(%arg0: i32, %arg1: i32) -> (i32, i32) {
    %c0_i32 = arith.constant 0 : i32
    %c0_i32_0 = arith.constant 0 : i32
    %c0_i32_1 = arith.constant 0 : i32
    return %c0_i32, %c0_i32_0 : i32, i32
  }
  func.func @transform_9(%arg0: i32, %arg1: i32) -> (i32, i32) {
    %c0_i32 = arith.constant 0 : i32
    %c0_i32_0 = arith.constant 0 : i32
    %c0_i32_1 = arith.constant 0 : i32
    return %c0_i32, %c0_i32_0 : i32, i32
  }
  func.func @transform_10(%arg0: i32, %arg1: i32) -> (i32, i32) {
    %c0_i32 = arith.constant 0 : i32
    %c0_i32_0 = arith.constant 0 : i32
    %c0_i32_1 = arith.constant 0 : i32
    return %c0_i32, %c0_i32_0 : i32, i32
  }
  func.func @transform_11(%arg0: i32, %arg1: i32) -> (i32, i32) {
    %c0_i32 = arith.constant 0 : i32
    %c0_i32_0 = arith.constant 0 : i32
    %c0_i32_1 = arith.constant 0 : i32
    return %c0_i32, %c0_i32_0 : i32, i32
  }
  func.func @transform_12(%arg0: i32, %arg1: i32) -> (i32, i32) {
    %c0_i32 = arith.constant 0 : i32
    %c0_i32_0 = arith.constant 0 : i32
    %c0_i32_1 = arith.constant 0 : i32
    return %c0_i32, %c0_i32_0 : i32, i32
  }
  func.func @transform_13(%arg0: i32, %arg1: i32) -> (i32, i32) {
    %c0_i32 = arith.constant 0 : i32
    %c0_i32_0 = arith.constant 0 : i32
    %c0_i32_1 = arith.constant 0 : i32
    return %c0_i32, %c0_i32_0 : i32, i32
  }
  func.func @transform_14(%arg0: i32, %arg1: i32) -> (i32, i32, i32) {
    %c0_i32 = arith.constant 0 : i32
    %c0_i32_0 = arith.constant 0 : i32
    return %arg0, %arg1, %c0_i32 : i32, i32, i32
  }
}

</mosaic_0001>

<llo_original>
// kernel: tpu_custom_call.1
$region0: #{tpu_custom_call.1}
  #allocation0 [shape = 'u32[]', space=smem, size = 0x4, offset = 0x4, fixed_abs, tag = 'smem constant byte address 0x4 - core index']
  #allocation1 [shape = 'u32[72,128]{1,0:T(1,128)}', space=vmem, size = 0x9000, scoped, tag = 'internal scratch']
  #allocation2 [shape = 'bf16[4,16,8]{2,1,0:T(8,128)(2,1)}', space=vmem, size = 0x4000, scoped, tag = 'scratch operand']
  #allocation3 [shape = 'bf16[4,16,8]{2,1,0:T(8,128)(2,1)}', space=vmem, size = 0x4000, scoped, tag = 'scratch operand']
  #allocation4 [shape = 'bf16[4,8,8]{2,1,0:T(8,128)(2,1)}', space=vmem, size = 0x2000, scoped, tag = 'scratch operand']
  #allocation5 [shape = 'f32[4,8,8]{2,1,0:T(8,128)}', space=vmem, size = 0x4000, scoped, tag = 'scratch operand']
  %s0 = inlined_call_operand.vmem [shape: f32[2,16,32], index: 0, kind: input, shape index: {}]
  %s1 = inlined_call_operand.vmem [shape: bf16[2,16,32], index: 1, kind: input, shape index: {}]
  %s2 = inlined_call_operand.hbm [shape: bf16[2,16,32], index: 2, kind: input, shape index: {}]
  %s3 = inlined_call_operand.hbm [shape: bf16[32,32], index: 3, kind: input, shape index: {}]
  %s4 = inlined_call_operand.hbm [shape: bf16[32,32], index: 4, kind: input, shape index: {}]
  %s5 = inlined_call_operand.hbm [shape: bf16[32,32], index: 5, kind: input, shape index: {}]
  %s6 = inlined_call_operand.vmem [shape: f32[1,32], index: 6, kind: input, shape index: {}]
  %s7 = inlined_call_operand.vmem [shape: f32[1,32], index: 7, kind: input, shape index: {}]
  %s8 = inlined_call_operand.hbm [shape: bf16[32,64], index: 8, kind: input, shape index: {}]
  %s9 = inlined_call_operand.vmem [shape: f32[1,64], index: 9, kind: input, shape index: {}]
  %s10 = inlined_call_operand.vmem [shape: bf16[64,32], index: 10, kind: input, shape index: {}]
  %s11 = inlined_call_operand.vmem [shape: f32[1,32], index: 11, kind: input, shape index: {}]
  %s12 = inlined_call_operand.vmem [shape: f32[1,32], index: 12, kind: input, shape index: {}]
  %s13 = inlined_call_operand.vmem [shape: f32[1,32], index: 13, kind: input, shape index: {}]
  %s14 = inlined_call_operand.hbm [shape: f32[2,16,32], index: 14, kind: output, shape index: {}]
  %s15 = sld [smem:[#allocation0]]
  $region120: #{tpu_custom_call.1} parent=0
    _
  %s17 = ssub.s32 1, %s15
  %s18 = scalar_select 0, %s17, %s15
  $region1: #{tpu_custom_call.1} parent=0
    #allocation6 [shape = 'u8[8192]{0}', space=vmem, size = 0x2000, scoped, tag = 'input window, operand 2']
    #allocation7 [shape = 's32[2]{0}', space=sflag, size = 0x8, scoped, tag = 'scoped memory for tpu_custom_call.1']
    #allocation8 [shape = 's32[2]{0}', space=sflag, size = 0x8, scoped, tag = 'scoped memory for tpu_custom_call.1']
    #allocation9 [shape = 'u8[8192]{0}', space=vmem, size = 0x2000, scoped, tag = 'input window, operand 3, single buffered']
    #allocation10 [shape = 's32[1]{0}', space=sflag, size = 0x4, scoped, tag = 'scoped memory for tpu_custom_call.1']
    #allocation11 [shape = 'u8[8192]{0}', space=vmem, size = 0x2000, scoped, tag = 'input window, operand 4, single buffered']
    #allocation12 [shape = 'u8[8192]{0}', space=vmem, size = 0x2000, scoped, tag = 'input window, operand 5, single buffered']
    #allocation13 [shape = 's32[1]{0}', space=sflag, size = 0x4, scoped, tag = 'scoped memory for tpu_custom_call.1']
    #allocation14 [shape = 'u8[8192]{0}', space=vmem, size = 0x2000, scoped, tag = 'input window, operand 8, single buffered']
    #allocation15 [shape = 'u8[8192]{0}', space=vmem, size = 0x2000, scoped, tag = 'output window, operand 0']
    %19 = vsyncpa [#allocation7], 0
    %s20 = scalar_lea.sflag [#allocation7], 1
    %21 = vsyncpa %s20, 0
    %22 = vsyncpa [#allocation10], 0
    %23 = vsyncpa [#allocation13], 0
    %24 = vsyncpa [#allocation8], 0
    %s25 = scalar_lea.sflag [#allocation8], 1
    %26 = vsyncpa %s25, 0
    loop: start=0, step=1, limit=6
    $region2: #{tpu_custom_call.1} parent=1 // loop_pre_header
      _
    $region3: #{tpu_custom_call.1} parent=1 // loop_header
      %s28 = sphi 0, %s32
      %p29 = scmp.ge.s32.totalorder %s28, 6
      %s35 = sphi 0, %s47
      %s36 = sphi 0, %s43
      %s37 = sphi 0, %s35
      %s38 = sphi 0, %s36
      %s39 = sphi 0, %s37
      %s40 = sphi 0, %s38
      %s52 = sphi 0, %s54
      %s55 = sphi 0, %s52
      %s56 = sphi 0, %s55
      %s72 = sphi 0, %s56
      %s78 = sphi 0, %s80
      %s81 = sphi 0, %s78
      %s82 = sphi 0, %s81
      %s98 = sphi 0, %s82
      %s104 = sphi 0, %s106
      %s107 = sphi 0, %s104
      %s108 = sphi 0, %s107
      %s124 = sphi 0, %s108
      %s128 = sphi 0, %s128
      %s130 = sphi 0, %s128
      %s131 = sphi 0, %s130
      %s145 = sphi 0, %s131
      %s149 = sphi 0, %s149
      %s151 = sphi 0, %s149
      %s152 = sphi 0, %s151
      %s166 = sphi 0, %s152
      %s170 = sphi 0, %s170
      %s172 = sphi 0, %s170
      %s173 = sphi 0, %s172
      %s187 = sphi 0, %s173
      %s191 = sphi 0, %s191
      %s193 = sphi 0, %s191
      %s194 = sphi 0, %s193
      %s208 = sphi 0, %s194
      %s212 = sphi 0, %s212
      %s214 = sphi 0, %s212
      %s215 = sphi 0, %s214
      %s229 = sphi 0, %s215
      %s233 = sphi 0, %s233
      %s235 = sphi 0, %s233
      %s236 = sphi 0, %s235
      %s250 = sphi 0, %s236
      %s254 = sphi 0, %s254
      %s256 = sphi 0, %s254
      %s257 = sphi 0, %s256
      %s271 = sphi 0, %s257
      %s275 = sphi 0, %s275
      %s277 = sphi 0, %s275
      %s278 = sphi 0, %s277
      %s292 = sphi 0, %s278
      %s296 = sphi 0, %s296
      %s298 = sphi 0, %s296
      %s299 = sphi 0, %s298
      %s313 = sphi 0, %s299
      %s317 = sphi 0, %s317
      %s319 = sphi 0, %s317
      %s320 = sphi 0, %s319
      %s334 = sphi 0, %s320
      %s338 = sphi 0, %s338
      %s340 = sphi 0, %s338
      %s341 = sphi 0, %s340
      %s355 = sphi 0, %s341
      %s363 = sphi 0, %s365
      %s366 = sphi 0, %s363
      %s367 = sphi 0, %s366
      %s383 = sphi 0, %s367
    $region4: #{tpu_custom_call.1} parent=1 // loop_header_branch
      %31 = sbr.rel (%p29) target = $region8
    $region5: #{tpu_custom_call.1} parent=1 // loop_body
      %s33 = ssub.s32 %s28, 1
      %s34 = ssub.s32 %s28, 2
      %s41 = sadd.s32 1, %s36
      %p42 = scmp.ge.s32.totalorder %s41, 2
      %s43 = scalar_select %p42, 0, %s41
      %s44 = sadd.s32 1, %s35
      %s45 = scalar_select %p42, %s44, %s35
      %p46 = scmp.ge.s32.totalorder %s45, 2
      %s47 = scalar_select %p46, 0, %s45
      %s48 = ssub.s32 %s35, %s47
      %s49 = ssub.s32 %s36, %s43
      %s50 = sor.u32 %s48, %s49
      %p51 = scmp.eq.s32.totalorder %s50, 0
      %s53 = sadd.s32 %s52, 1
      %s54 = scalar_select %p51, %s52, %s53
      %p57 = pneg %p51
      %p58 = scmp.eq.s32.totalorder %s28, 3
      %p59 = por %p57, %p58
      %p60 = scmp.ne.s32.totalorder %s52, %s55
      %p61 = scmp.eq.s32.totalorder %s28, 0
      %p62 = por %p60, %p61
      %p63 = scmp.ne.s32.totalorder %s52, %s55
      %p64 = scmp.eq.s32.totalorder %s33, 3
      %p65 = por %p63, %p64
      %p66 = scmp.ne.s32.totalorder %s55, %s56
      %p67 = scmp.eq.s32.totalorder %s33, 0
      %p68 = por %p66, %p67
      %p69 = scmp.ne.s32.totalorder %s55, %s56
      %p70 = scmp.eq.s32.totalorder %s34, 3
      %p71 = por %p69, %p70
      %p73 = scmp.ne.s32.totalorder %s56, %s72
      %p74 = scmp.eq.s32.totalorder %s34, 0
      %p75 = por %p73, %p74
      %s76 = ssub.s32 %s35, %s47
      %p77 = scmp.eq.s32.totalorder %s76, 0
      %s79 = sadd.s32 %s78, 1
      %s80 = scalar_select %p77, %s78, %s79
      %p83 = pneg %p77
      %p84 = scmp.eq.s32.totalorder %s28, 3
      %p85 = por %p83, %p84
      %p86 = scmp.ne.s32.totalorder %s78, %s81
      %p87 = scmp.eq.s32.totalorder %s28, 0
      %p88 = por %p86, %p87
      %p89 = scmp.ne.s32.totalorder %s78, %s81
      %p90 = scmp.eq.s32.totalorder %s33, 3
      %p91 = por %p89, %p90
      %p92 = scmp.ne.s32.totalorder %s81, %s82
      %p93 = scmp.eq.s32.totalorder %s33, 0
      %p94 = por %p92, %p93
      %p95 = scmp.ne.s32.totalorder %s81, %s82
      %p96 = scmp.eq.s32.totalorder %s34, 3
      %p97 = por %p95, %p96
      %p99 = scmp.ne.s32.totalorder %s82, %s98
      %p100 = scmp.eq.s32.totalorder %s34, 0
      %p101 = por %p99, %p100
      %s102 = ssub.s32 %s35, %s47
      %p103 = scmp.eq.s32.totalorder %s102, 0
      %s105 = sadd.s32 %s104, 1
      %s106 = scalar_select %p103, %s104, %s105
      %p109 = pneg %p103
      %p110 = scmp.eq.s32.totalorder %s28, 3
      %p111 = por %p109, %p110
      %p112 = scmp.ne.s32.totalorder %s104, %s107
      %p113 = scmp.eq.s32.totalorder %s28, 0
      %p114 = por %p112, %p113
      %p115 = scmp.ne.s32.totalorder %s104, %s107
      %p116 = scmp.eq.s32.totalorder %s33, 3
      %p117 = por %p115, %p116
      %p118 = scmp.ne.s32.totalorder %s107, %s108
      %p119 = scmp.eq.s32.totalorder %s33, 0
      %p120 = por %p118, %p119
      %p121 = scmp.ne.s32.totalorder %s107, %s108
      %p122 = scmp.eq.s32.totalorder %s34, 3
      %p123 = por %p121, %p122
      %p125 = scmp.ne.s32.totalorder %s108, %s124
      %p126 = scmp.eq.s32.totalorder %s34, 0
      %p127 = por %p125, %p126
      %s129 = sadd.s32 %s128, 1
      %p132 = scmp.eq.s32.totalorder %s28, 3
      %p133 = scmp.ne.s32.totalorder %s128, %s130
      %p134 = scmp.eq.s32.totalorder %s28, 0
      %p135 = por %p133, %p134
      %p136 = scmp.ne.s32.totalorder %s128, %s130
      %p137 = scmp.eq.s32.totalorder %s33, 3
      %p138 = por %p136, %p137
      %p139 = scmp.ne.s32.totalorder %s130, %s131
      %p140 = scmp.eq.s32.totalorder %s33, 0
      %p141 = por %p139, %p140
      %p142 = scmp.ne.s32.totalorder %s130, %s131
      %p143 = scmp.eq.s32.totalorder %s34, 3
      %p144 = por %p142, %p143
      %p146 = scmp.ne.s32.totalorder %s131, %s145
      %p147 = scmp.eq.s32.totalorder %s34, 0
      %p148 = por %p146, %p147
      %s150 = sadd.s32 %s149, 1
      %p153 = scmp.eq.s32.totalorder %s28, 3
      %p154 = scmp.ne.s32.totalorder %s149, %s151
      %p155 = scmp.eq.s32.totalorder %s28, 0
      %p156 = por %p154, %p155
      %p157 = scmp.ne.s32.totalorder %s149, %s151
      %p158 = scmp.eq.s32.totalorder %s33, 3
      %p159 = por %p157, %p158
      %p160 = scmp.ne.s32.totalorder %s151, %s152
      %p161 = scmp.eq.s32.totalorder %s33, 0
      %p162 = por %p160, %p161
      %p163 = scmp.ne.s32.totalorder %s151, %s152
      %p164 = scmp.eq.s32.totalorder %s34, 3
      %p165 = por %p163, %p164
      %p167 = scmp.ne.s32.totalorder %s152, %s166
      %p168 = scmp.eq.s32.totalorder %s34, 0
      %p169 = por %p167, %p168
      %s171 = sadd.s32 %s170, 1
      %p174 = scmp.eq.s32.totalorder %s28, 3
      %p175 = scmp.ne.s32.totalorder %s170, %s172
      %p176 = scmp.eq.s32.totalorder %s28, 0
      %p177 = por %p175, %p176
      %p178 = scmp.ne.s32.totalorder %s170, %s172
      %p179 = scmp.eq.s32.totalorder %s33, 3
      %p180 = por %p178, %p179
      %p181 = scmp.ne.s32.totalorder %s172, %s173
      %p182 = scmp.eq.s32.totalorder %s33, 0
      %p183 = por %p181, %p182
      %p184 = scmp.ne.s32.totalorder %s172, %s173
      %p185 = scmp.eq.s32.totalorder %s34, 3
      %p186 = por %p184, %p185
      %p188 = scmp.ne.s32.totalorder %s173, %s187
      %p189 = scmp.eq.s32.totalorder %s34, 0
      %p190 = por %p188, %p189
      %s192 = sadd.s32 %s191, 1
      %p195 = scmp.eq.s32.totalorder %s28, 3
      %p196 = scmp.ne.s32.totalorder %s191, %s193
      %p197 = scmp.eq.s32.totalorder %s28, 0
      %p198 = por %p196, %p197
      %p199 = scmp.ne.s32.totalorder %s191, %s193
      %p200 = scmp.eq.s32.totalorder %s33, 3
      %p201 = por %p199, %p200
      %p202 = scmp.ne.s32.totalorder %s193, %s194
      %p203 = scmp.eq.s32.totalorder %s33, 0
      %p204 = por %p202, %p203
      %p205 = scmp.ne.s32.totalorder %s193, %s194
      %p206 = scmp.eq.s32.totalorder %s34, 3
      %p207 = por %p205, %p206
      %p209 = scmp.ne.s32.totalorder %s194, %s208
      %p210 = scmp.eq.s32.totalorder %s34, 0
      %p211 = por %p209, %p210
      %s213 = sadd.s32 %s212, 1
      %p216 = scmp.eq.s32.totalorder %s28, 3
      %p217 = scmp.ne.s32.totalorder %s212, %s214
      %p218 = scmp.eq.s32.totalorder %s28, 0
      %p219 = por %p217, %p218
      %p220 = scmp.ne.s32.totalorder %s212, %s214
      %p221 = scmp.eq.s32.totalorder %s33, 3
      %p222 = por %p220, %p221
      %p223 = scmp.ne.s32.totalorder %s214, %s215
      %p224 = scmp.eq.s32.totalorder %s33, 0
      %p225 = por %p223, %p224
      %p226 = scmp.ne.s32.totalorder %s214, %s215
      %p227 = scmp.eq.s32.totalorder %s34, 3
      %p228 = por %p226, %p227
      %p230 = scmp.ne.s32.totalorder %s215, %s229
      %p231 = scmp.eq.s32.totalorder %s34, 0
      %p232 = por %p230, %p231
      %s234 = sadd.s32 %s233, 1
      %p237 = scmp.eq.s32.totalorder %s28, 3
      %p238 = scmp.ne.s32.totalorder %s233, %s235
      %p239 = scmp.eq.s32.totalorder %s28, 0
      %p240 = por %p238, %p239
      %p241 = scmp.ne.s32.totalorder %s233, %s235
      %p242 = scmp.eq.s32.totalorder %s33, 3
      %p243 = por %p241, %p242
      %p244 = scmp.ne.s32.totalorder %s235, %s236
      %p245 = scmp.eq.s32.totalorder %s33, 0
      %p246 = por %p244, %p245
      %p247 = scmp.ne.s32.totalorder %s235, %s236
      %p248 = scmp.eq.s32.totalorder %s34, 3
      %p249 = por %p247, %p248
      %p251 = scmp.ne.s32.totalorder %s236, %s250
      %p252 = scmp.eq.s32.totalorder %s34, 0
      %p253 = por %p251, %p252
      %s255 = sadd.s32 %s254, 1
      %p258 = scmp.eq.s32.totalorder %s28, 3
      %p259 = scmp.ne.s32.totalorder %s254, %s256
      %p260 = scmp.eq.s32.totalorder %s28, 0
      %p261 = por %p259, %p260
      %p262 = scmp.ne.s32.totalorder %s254, %s256
      %p263 = scmp.eq.s32.totalorder %s33, 3
      %p264 = por %p262, %p263
      %p265 = scmp.ne.s32.totalorder %s256, %s257
      %p266 = scmp.eq.s32.totalorder %s33, 0
      %p267 = por %p265, %p266
      %p268 = scmp.ne.s32.totalorder %s256, %s257
      %p269 = scmp.eq.s32.totalorder %s34, 3
      %p270 = por %p268, %p269
      %p272 = scmp.ne.s32.totalorder %s257, %s271
      %p273 = scmp.eq.s32.totalorder %s34, 0
      %p274 = por %p272, %p273
      %s276 = sadd.s32 %s275, 1
      %p279 = scmp.eq.s32.totalorder %s28, 3
      %p280 = scmp.ne.s32.totalorder %s275, %s277
      %p281 = scmp.eq.s32.totalorder %s28, 0
      %p282 = por %p280, %p281
      %p283 = scmp.ne.s32.totalorder %s275, %s277
      %p284 = scmp.eq.s32.totalorder %s33, 3
      %p285 = por %p283, %p284
      %p286 = scmp.ne.s32.totalorder %s277, %s278
      %p287 = scmp.eq.s32.totalorder %s33, 0
      %p288 = por %p286, %p287
      %p289 = scmp.ne.s32.totalorder %s277, %s278
      %p290 = scmp.eq.s32.totalorder %s34, 3
      %p291 = por %p289, %p290
      %p293 = scmp.ne.s32.totalorder %s278, %s292
      %p294 = scmp.eq.s32.totalorder %s34, 0
      %p295 = por %p293, %p294
      %s297 = sadd.s32 %s296, 1
      %p300 = scmp.eq.s32.totalorder %s28, 3
      %p301 = scmp.ne.s32.totalorder %s296, %s298
      %p302 = scmp.eq.s32.totalorder %s28, 0
      %p303 = por %p301, %p302
      %p304 = scmp.ne.s32.totalorder %s296, %s298
      %p305 = scmp.eq.s32.totalorder %s33, 3
      %p306 = por %p304, %p305
      %p307 = scmp.ne.s32.totalorder %s298, %s299
      %p308 = scmp.eq.s32.totalorder %s33, 0
      %p309 = por %p307, %p308
      %p310 = scmp.ne.s32.totalorder %s298, %s299
      %p311 = scmp.eq.s32.totalorder %s34, 3
      %p312 = por %p310, %p311
      %p314 = scmp.ne.s32.totalorder %s299, %s313
      %p315 = scmp.eq.s32.totalorder %s34, 0
      %p316 = por %p314, %p315
      %s318 = sadd.s32 %s317, 1
      %p321 = scmp.eq.s32.totalorder %s28, 3
      %p322 = scmp.ne.s32.totalorder %s317, %s319
      %p323 = scmp.eq.s32.totalorder %s28, 0
      %p324 = por %p322, %p323
      %p325 = scmp.ne.s32.totalorder %s317, %s319
      %p326 = scmp.eq.s32.totalorder %s33, 3
      %p327 = por %p325, %p326
      %p328 = scmp.ne.s32.totalorder %s319, %s320
      %p329 = scmp.eq.s32.totalorder %s33, 0
      %p330 = por %p328, %p329
      %p331 = scmp.ne.s32.totalorder %s319, %s320
      %p332 = scmp.eq.s32.totalorder %s34, 3
      %p333 = por %p331, %p332
      %p335 = scmp.ne.s32.totalorder %s320, %s334
      %p336 = scmp.eq.s32.totalorder %s34, 0
      %p337 = por %p335, %p336
      %s339 = sadd.s32 %s338, 1
      %p342 = scmp.eq.s32.totalorder %s28, 3
      %p343 = scmp.ne.s32.totalorder %s338, %s340
      %p344 = scmp.eq.s32.totalorder %s28, 0
      %p345 = por %p343, %p344
      %p346 = scmp.ne.s32.totalorder %s338, %s340
      %p347 = scmp.eq.s32.totalorder %s33, 3
      %p348 = por %p346, %p347
      %p349 = scmp.ne.s32.totalorder %s340, %s341
      %p350 = scmp.eq.s32.totalorder %s33, 0
      %p351 = por %p349, %p350
      %p352 = scmp.ne.s32.totalorder %s340, %s341
      %p353 = scmp.eq.s32.totalorder %s34, 3
      %p354 = por %p352, %p353
      %p356 = scmp.ne.s32.totalorder %s341, %s355
      %p357 = scmp.eq.s32.totalorder %s34, 0
      %p358 = por %p356, %p357
      %s359 = ssub.s32 %s35, %s47
      %s360 = ssub.s32 %s36, %s43
      %s361 = sor.u32 %s359, %s360
      %p362 = scmp.eq.s32.totalorder %s361, 0
      %s364 = sadd.s32 %s363, 1
      %s365 = scalar_select %p362, %s363, %s364
      %p368 = pneg %p362
      %p369 = scmp.eq.s32.totalorder %s28, 3
      %p370 = por %p368, %p369
      %p371 = scmp.ne.s32.totalorder %s363, %s366
      %p372 = scmp.eq.s32.totalorder %s28, 0
      %p373 = por %p371, %p372
      %p374 = scmp.ne.s32.totalorder %s363, %s366
      %p375 = scmp.eq.s32.totalorder %s33, 3
      %p376 = por %p374, %p375
      %p377 = scmp.ne.s32.totalorder %s366, %s367
      %p378 = scmp.eq.s32.totalorder %s33, 0
      %p379 = por %p377, %p378
      %p380 = scmp.ne.s32.totalorder %s366, %s367
      %p381 = scmp.eq.s32.totalorder %s34, 3
      %p382 = por %p380, %p381
      %p384 = scmp.ne.s32.totalorder %s367, %s383
      %p385 = scmp.eq.s32.totalorder %s34, 0
      %p386 = por %p384, %p385
      %p387 = scmp.le.s32.totalorder 1, %s28
      %p388 = scmp.lt.s32.totalorder %s28, 5
      %p389 = pnand %p387, %p388
      %p390 = pneg %p389
      // Predicated region
      $region9: #{tpu_custom_call.1} parent=5 // pred_check
        _
      $region10: #{tpu_custom_call.1} parent=5 // pred_check_branch
        %392 = sbr.rel (%p389) target = $region12
      $region11: #{tpu_custom_call.1} parent=5 // pred_region
        %s393 = ssub.s32 %s28, 1
        // Predicated region
        $region13: #{tpu_custom_call.1} parent=11 // pred_check
          %p394 = pneg %p141
        $region14: #{tpu_custom_call.1} parent=11 // pred_check_branch
          %396 = sbr.rel (%p394) target = $region16
        $region15: #{tpu_custom_call.1} parent=11 // pred_region
          %398 = vsyncadd [#allocation10], 0
          %s399 = sshll.u32 %s3, 4
          %s400 = int_to_ptr.hbm [resolvable:$true] %s399
          %s401 = sshll.u32 [#allocation9], 4
          %s402 = int_to_ptr.vmem [resolvable:$true] %s401
          %407 = dma.hbm_to_vmem [thread:$0]  %s400, 256, %s402, [#allocation10], 64, 64, 4
        $region16: #{tpu_custom_call.1} parent=11 // pred_fallthru
          _
        // Predicated region
        $region17: #{tpu_custom_call.1} parent=11 // pred_check
          %p408 = pneg %p162
        $region18: #{tpu_custom_call.1} parent=11 // pred_check_branch
          %410 = sbr.rel (%p408) target = $region20
        $region19: #{tpu_custom_call.1} parent=11 // pred_region
          %412 = vsyncadd [#allocation10], 0
          %s413 = sshll.u32 %s4, 4
          %s414 = int_to_ptr.hbm [resolvable:$true] %s413
          %s415 = sshll.u32 [#allocation11], 4
          %s416 = int_to_ptr.vmem [resolvable:$true] %s415
          %421 = dma.hbm_to_vmem [thread:$0]  %s414, 256, %s416, [#allocation10], 64, 64, 4
        $region20: #{tpu_custom_call.1} parent=11 // pred_fallthru
          _
        // Predicated region
        $region21: #{tpu_custom_call.1} parent=11 // pred_check
          %p422 = pneg %p183
        $region22: #{tpu_custom_call.1} parent=11 // pred_check_branch
          %424 = sbr.rel (%p422) target = $region24
        $region23: #{tpu_custom_call.1} parent=11 // pred_region
          %426 = vsyncadd [#allocation13], 0
          %s427 = sshll.u32 %s5, 4
          %s428 = int_to_ptr.hbm [resolvable:$true] %s427
          %s429 = sshll.u32 [#allocation12], 4
          %s430 = int_to_ptr.vmem [resolvable:$true] %s429
          %435 = dma.hbm_to_vmem [thread:$0]  %s428, 256, %s430, [#allocation13], 64, 64, 4
        $region24: #{tpu_custom_call.1} parent=11 // pred_fallthru
          _
        // Predicated region
        $region25: #{tpu_custom_call.1} parent=11 // pred_check
          %p436 = pneg %p204
        $region26: #{tpu_custom_call.1} parent=11 // pred_check_branch
          %438 = sbr.rel (%p436) target = $region28
        $region27: #{tpu_custom_call.1} parent=11 // pred_region
          _
        $region28: #{tpu_custom_call.1} parent=11 // pred_fallthru
          _
        // Predicated region
        $region29: #{tpu_custom_call.1} parent=11 // pred_check
          %p439 = pneg %p225
        $region30: #{tpu_custom_call.1} parent=11 // pred_check_branch
          %441 = sbr.rel (%p439) target = $region32
        $region31: #{tpu_custom_call.1} parent=11 // pred_region
          _
        $region32: #{tpu_custom_call.1} parent=11 // pred_fallthru
          _
        // Predicated region
        $region33: #{tpu_custom_call.1} parent=11 // pred_check
          %p442 = pneg %p246
        $region34: #{tpu_custom_call.1} parent=11 // pred_check_branch
          %444 = sbr.rel (%p442) target = $region36
        $region35: #{tpu_custom_call.1} parent=11 // pred_region
          %446 = vsyncadd [#allocation13], 0
          %s447 = sshll.u32 %s8, 4
          %s448 = int_to_ptr.hbm [resolvable:$true] %s447
          %s449 = sshll.u32 [#allocation14], 4
          %s450 = int_to_ptr.vmem [resolvable:$true] %s449
          %455 = dma.hbm_to_vmem [thread:$0]  %s448, 256, %s450, [#allocation13], 64, 64, 4
        $region36: #{tpu_custom_call.1} parent=11 // pred_fallthru
          _
        // Predicated region
        $region37: #{tpu_custom_call.1} parent=11 // pred_check
          %p456 = pneg %p267
        $region38: #{tpu_custom_call.1} parent=11 // pred_check_branch
          %458 = sbr.rel (%p456) target = $region40
        $region39: #{tpu_custom_call.1} parent=11 // pred_region
          _
        $region40: #{tpu_custom_call.1} parent=11 // pred_fallthru
          _
        // Predicated region
        $region41: #{tpu_custom_call.1} parent=11 // pred_check
          %p459 = pneg %p288
        $region42: #{tpu_custom_call.1} parent=11 // pred_check_branch
          %461 = sbr.rel (%p459) target = $region44
        $region43: #{tpu_custom_call.1} parent=11 // pred_region
          _
        $region44: #{tpu_custom_call.1} parent=11 // pred_fallthru
          _
        // Predicated region
        $region45: #{tpu_custom_call.1} parent=11 // pred_check
          %p462 = pneg %p309
        $region46: #{tpu_custom_call.1} parent=11 // pred_check_branch
          %464 = sbr.rel (%p462) target = $region48
        $region47: #{tpu_custom_call.1} parent=11 // pred_region
          _
        $region48: #{tpu_custom_call.1} parent=11 // pred_fallthru
          _
        // Predicated region
        $region49: #{tpu_custom_call.1} parent=11 // pred_check
          %p465 = pneg %p330
        $region50: #{tpu_custom_call.1} parent=11 // pred_check_branch
          %467 = sbr.rel (%p465) target = $region52
        $region51: #{tpu_custom_call.1} parent=11 // pred_region
          _
        $region52: #{tpu_custom_call.1} parent=11 // pred_fallthru
          _
        // Predicated region
        $region53: #{tpu_custom_call.1} parent=11 // pred_check
          %p468 = pneg %p351
        $region54: #{tpu_custom_call.1} parent=11 // pred_check_branch
          %470 = sbr.rel (%p468) target = $region56
        $region55: #{tpu_custom_call.1} parent=11 // pred_region
          _
        $region56: #{tpu_custom_call.1} parent=11 // pred_fallthru
          _
      $region12: #{tpu_custom_call.1} parent=5 // pred_fallthru
        _
      %p471 = scmp.lt.s32.totalorder %s28, 4
      // Predicated region
      $region57: #{tpu_custom_call.1} parent=5 // pred_check
        %p472 = pneg %p471
      $region58: #{tpu_custom_call.1} parent=5 // pred_check_branch
        %474 = sbr.rel (%p472) target = $region60
      $region59: #{tpu_custom_call.1} parent=5 // pred_region
        // Predicated region
        $region61: #{tpu_custom_call.1} parent=59 // pred_check
          %p475 = pneg %p62
        $region62: #{tpu_custom_call.1} parent=59 // pred_check_branch
          %477 = sbr.rel (%p475) target = $region64
        $region63: #{tpu_custom_call.1} parent=59 // pred_region
          %p478 = scmp.lt.s32.totalorder %s35, 1
          %s479 = scalar_select %p478, %s35, 1
          %p480 = scmp.lt.s32.totalorder %s36, 1
          %s481 = scalar_select %p480, %s36, 1
          %s482 = smul.addr %s479, 2
          %s483 = sadd.s32 %s481, %s482
          %s484 = smul.addr %s483, 8
          %s485 = scalar_lea.vmem %s0, %s484
        $region64: #{tpu_custom_call.1} parent=59 // pred_fallthru
          _
        // Predicated region
        $region65: #{tpu_custom_call.1} parent=59 // pred_check
          %p486 = pneg %p88
        $region66: #{tpu_custom_call.1} parent=59 // pred_check_branch
          %488 = sbr.rel (%p486) target = $region68
        $region67: #{tpu_custom_call.1} parent=59 // pred_region
          %p489 = scmp.lt.s32.totalorder %s35, 1
          %s490 = scalar_select %p489, %s35, 1
          %s491 = smul.addr %s490, 2
          %s492 = smul.addr %s491, 4
          %s493 = scalar_lea.vmem %s1, %s492
        $region68: #{tpu_custom_call.1} parent=59 // pred_fallthru
          _
        // Predicated region
        $region69: #{tpu_custom_call.1} parent=59 // pred_check
          %p494 = pneg %p114
        $region70: #{tpu_custom_call.1} parent=59 // pred_check_branch
          %496 = sbr.rel (%p494) target = $region72
        $region71: #{tpu_custom_call.1} parent=59 // pred_region
          %s497 = sand.u32 %s104, 1
          %s498 = scalar_lea.sflag [#allocation7], %s497
          %s499 = sand.u32 %s104, 1
          %s500 = smul.addr %s499, 8
          %s501 = scalar_lea.vmem [#allocation6], %s500
          %503 = vsyncadd %s498, 0
          %s504 = smul.addr %s35, 2
          %s505 = smul.addr %s504, 4
          %s506 = scalar_lea.hbm %s2, %s505
          %s507 = sshll.u32 %s506, 4
          %s508 = int_to_ptr.hbm [resolvable:$true] %s507
          %s509 = sshll.u32 %s501, 4
          %s510 = int_to_ptr.vmem [resolvable:$true] %s509
          %515 = dma.hbm_to_vmem [thread:$0]  %s508, 128, %s510, %s498, 64, 64, 4
        $region72: #{tpu_custom_call.1} parent=59 // pred_fallthru
          _
      $region60: #{tpu_custom_call.1} parent=5 // pred_fallthru
        _
      %p516 = scmp.le.s32.totalorder 1, %s28
      %p517 = scmp.lt.s32.totalorder %s28, 5
      %p518 = pnand %p516, %p517
      %p519 = pneg %p518
      // Predicated region
      $region73: #{tpu_custom_call.1} parent=5 // pred_check
        _
      $region74: #{tpu_custom_call.1} parent=5 // pred_check_branch
        %521 = sbr.rel (%p518) target = $region76
      $region75: #{tpu_custom_call.1} parent=5 // pred_region
        %s522 = ssub.s32 %s28, 1
        %s523 = sand.u32 %s107, 1
        %s524 = scalar_lea.sflag [#allocation7], %s523
        %s525 = sand.u32 %s107, 1
        %s526 = smul.addr %s525, 8
        %s527 = scalar_lea.vmem [#allocation6], %s526
        // Predicated region
        $region77: #{tpu_custom_call.1} parent=75 // pred_check
          %p528 = pneg %p120
        $region78: #{tpu_custom_call.1} parent=75 // pred_check_branch
          %530 = sbr.rel (%p528) target = $region80
        $region79: #{tpu_custom_call.1} parent=75 // pred_region
          %532 = dma.done %s524, 128
        $region80: #{tpu_custom_call.1} parent=75 // pred_fallthru
          _
        // Predicated region
        $region81: #{tpu_custom_call.1} parent=75 // pred_check
          %p533 = pneg %p141
        $region82: #{tpu_custom_call.1} parent=75 // pred_check_branch
          %535 = sbr.rel (%p533) target = $region84
        $region83: #{tpu_custom_call.1} parent=75 // pred_region
          %537 = dma.done [#allocation10], 256
        $region84: #{tpu_custom_call.1} parent=75 // pred_fallthru
          _
        // Predicated region
        $region85: #{tpu_custom_call.1} parent=75 // pred_check
          %p538 = pneg %p162
        $region86: #{tpu_custom_call.1} parent=75 // pred_check_branch
          %540 = sbr.rel (%p538) target = $region88
        $region87: #{tpu_custom_call.1} parent=75 // pred_region
          %542 = dma.done [#allocation10], 256
        $region88: #{tpu_custom_call.1} parent=75 // pred_fallthru
          _
        // Predicated region
        $region89: #{tpu_custom_call.1} parent=75 // pred_check
          %p543 = pneg %p183
        $region90: #{tpu_custom_call.1} parent=75 // pred_check_branch
          %545 = sbr.rel (%p543) target = $region92
        $region91: #{tpu_custom_call.1} parent=75 // pred_region
          %547 = dma.done [#allocation13], 256
        $region92: #{tpu_custom_call.1} parent=75 // pred_fallthru
          _
        // Predicated region
        $region93: #{tpu_custom_call.1} parent=75 // pred_check
          %p548 = pneg %p246
        $region94: #{tpu_custom_call.1} parent=75 // pred_check_branch
          %550 = sbr.rel (%p548) target = $region96
        $region95: #{tpu_custom_call.1} parent=75 // pred_region
          %552 = dma.done [#allocation13], 256
        $region96: #{tpu_custom_call.1} parent=75 // pred_fallthru
          _
        %p553 = scmp.lt.s32.totalorder %s37, 1
        %s554 = scalar_select %p553, %s37, 1
        %p555 = scmp.lt.s32.totalorder %s38, 1
        %s556 = scalar_select %p555, %s38, 1
        %s557 = smul.addr %s554, 2
        %s558 = sadd.s32 %s556, %s557
        %s559 = smul.addr %s558, 8
        %s560 = scalar_lea.vmem %s0, %s559
        %p561 = pneg %p68
        %p562 = pneg %p65
        %p563 = scmp.lt.s32.totalorder %s37, 1
        %s564 = scalar_select %p563, %s37, 1
        %s565 = smul.addr %s564, 2
        %s566 = smul.addr %s565, 4
        %s567 = scalar_lea.vmem %s1, %s566
        %p568 = pneg %p94
        %p569 = pneg %p91
        %s570 = sand.u32 %s107, 1
        %s571 = scalar_lea.sflag [#allocation7], %s570
        %s572 = sand.u32 %s107, 1
        %s573 = smul.addr %s572, 8
        %s574 = scalar_lea.vmem [#allocation6], %s573
        %p575 = pneg %p120
        %p576 = pneg %p117
        %p577 = pneg %p141
        %p578 = pneg %p138
        %p579 = pneg %p162
        %p580 = pneg %p159
        %p581 = pneg %p183
        %p582 = pneg %p180
        %p583 = pneg %p204
        %p584 = pneg %p201
        %p585 = pneg %p225
        %p586 = pneg %p222
        %p587 = pneg %p246
        %p588 = pneg %p243
        %p589 = pneg %p267
        %p590 = pneg %p264
        %p591 = pneg %p288
        %p592 = pneg %p285
        %p593 = pneg %p309
        %p594 = pneg %p306
        %p595 = pneg %p330
        %p596 = pneg %p327
        %p597 = pneg %p351
        %p598 = pneg %p348
        %p599 = pneg %p379
        %p600 = pneg %p376
        %s601 = sand.u32 %s366, 1
        %s602 = scalar_lea.sflag [#allocation8], %s601
        %s603 = sand.u32 %s366, 1
        %s604 = smul.addr %s603, 8
        %s605 = scalar_lea.vmem [#allocation15], %s604
        %p606 = scmp.lt.s32.totalorder %s37, 1
        %s607 = scalar_select %p606, %s37, 1
        %p608 = scmp.lt.s32.totalorder %s38, 1
        %s609 = scalar_select %p608, %s38, 1
        %s610 = smul.addr %s607, 2
        %s611 = sadd.s32 %s609, %s610
        %s612 = smul.addr %s611, 8
        %s613 = scalar_lea.vmem %s0, %s612
        %p614 = scmp.lt.s32.totalorder %s37, 1
        %s615 = scalar_select %p614, %s37, 1
        %s616 = smul.addr %s615, 2
        %s617 = smul.addr %s616, 4
        %s618 = scalar_lea.vmem %s1, %s617
        %p620 = scmp.eq.s32.totalorder %s38, 0
        // Predicated region
        $region97: #{tpu_custom_call.1} parent=75 // pred_check
          %p621 = pneg %p620
        $region98: #{tpu_custom_call.1} parent=75 // pred_check_branch
          %623 = sbr.rel (%p621) target = $region100
        $region99: #{tpu_custom_call.1} parent=75 // pred_region
          %v624 = vld [vmem:[%s618] sm:$0xf]
          %v625 = vld [vmem:[%s618 + $0x4] sm:$0xf]
          %v626 = vld [vmem:[#allocation11] sm:$0xf]
          %v627 = vld [vmem:[#allocation11 + $0x4] sm:$0xf]
          %v628 = vld [vmem:[#allocation11 + $0x8] sm:$0xf]
          %v629 = vld [vmem:[#allocation11 + $0xc] sm:$0xf]
          %v632 = vunpack.c.l.b16 %v624
          %v633 = vunpack.c.l.b16 %v625
          %v634 = vpack.c.b16 %v633, %v632
          %v639 = vunpack.c.l.b16 %v626
          %v640 = vunpack.c.l.b16 %v627
          %v641 = vunpack.c.l.b16 %v628
          %v642 = vunpack.c.l.b16 %v629
          %v643 = vpack.c.b16 %v640, %v639
          %v644 = vpack.c.b16 %v642, %v641
          %vm647 = vcmask 261120
          %v649 = vsel %vm647, %v634, 0
          %651 = vmatpush.bf16.msra.mxu0 0
          %652 = vmatpush.bf16.msra.mxu0 0
          %653 = vmatpush.bf16.msra.mxu0 0
          %654 = vmatpush.bf16.msra.mxu0 0
          %655 = vmatpush.bf16.msra.mxu0 0
          %656 = vmatpush.bf16.msra.mxu0 0
          %657 = vmatpush.bf16.msra.mxu0 %v644
          %658 = vmatpush.bf16.msra.mxu0 %v643
          %659 = vmatmul.bf16.gmra.mxu0 %v649
          %v660 = vpop.f32.mrf.mxu0
          %v661 = vadd.f32 0.0, %v660
          %v662 = vpop.f32.mrf.mxu0
          %v663 = vadd.f32 0.0, %v662
          %664 = vdwg.mxu0
          %v665 = vld [vmem:[%s527] sm:$0xf]
          %v666 = vld [vmem:[%s527 + $0x4] sm:$0xf]
          %v667 = vld [vmem:[#allocation12] sm:$0xf]
          %v668 = vld [vmem:[#allocation12 + $0x4] sm:$0xf]
          %v669 = vld [vmem:[#allocation12 + $0x8] sm:$0xf]
          %v670 = vld [vmem:[#allocation12 + $0xc] sm:$0xf]
          %v673 = vunpack.c.l.b16 %v665
          %v674 = vunpack.c.l.b16 %v666
          %v675 = vpack.c.b16 %v674, %v673
          %v680 = vunpack.c.l.b16 %v667
          %v681 = vunpack.c.l.b16 %v668
          %v682 = vunpack.c.l.b16 %v669
          %v683 = vunpack.c.l.b16 %v670
          %v684 = vpack.c.b16 %v681, %v680
          %v685 = vpack.c.b16 %v683, %v682
          %v689 = vsel %vm647, %v675, 0
          %691 = vmatpush.bf16.msra.mxu0 0
          %692 = vmatpush.bf16.msra.mxu0 0
          %693 = vmatpush.bf16.msra.mxu0 0
          %694 = vmatpush.bf16.msra.mxu0 0
          %695 = vmatpush.bf16.msra.mxu0 0
          %696 = vmatpush.bf16.msra.mxu0 0
          %697 = vmatpush.bf16.msra.mxu0 %v685
          %698 = vmatpush.bf16.msra.mxu0 %v684
          %699 = vmatmul.bf16.gmra.mxu0 %v689
          %v700 = vpop.f32.mrf.mxu0
          %v701 = vadd.f32 0.0, %v700
          %v702 = vpop.f32.mrf.mxu0
          %v703 = vadd.f32 0.0, %v702
          %704 = vdwg.mxu0
          %v705 = vpack.c.bf16 %v661, %v661
          %v706 = vpack.c.bf16 %v663, %v663
          %v707 = vpack.c.bf16 %v701, %v701
          %v708 = vpack.c.bf16 %v703, %v703
          %vm709 = vcmask 60416
          %710 = vst.msk [vmem:[#allocation2] sm:$0xf] %vm709, %v705
          %711 = vst.msk [vmem:[#allocation2 + $0x4] sm:$0xf] %vm709, %v706
          %712 = vst.msk [vmem:[#allocation3] sm:$0xf] %vm709, %v707
          %713 = vst.msk [vmem:[#allocation3 + $0x4] sm:$0xf] %vm709, %v708
          %716 = vrot.lane.b32.xlu0 %v705, 120
          %v717 = vpop.permute.xlu0 %716
          %718 = vrot.lane.b32.xlu0 %v706, 120
          %v719 = vpop.permute.xlu0 %718
          %s722 = scalar_lea.vmem [#allocation2], 8
          %723 = vst.msk [vmem:[%s722] sm:$0xf] %vm709, %v717
          %724 = vst.msk [vmem:[%s722 + $0x4] sm:$0xf] %vm709, %v719
          %727 = vrot.lane.b32.xlu0 %v707, 120
          %v728 = vpop.permute.xlu0 %727
          %729 = vrot.lane.b32.xlu0 %v708, 120
          %v730 = vpop.permute.xlu0 %729
          %s733 = scalar_lea.vmem [#allocation3], 8
          %734 = vst.msk [vmem:[%s733] sm:$0xf] %vm709, %v728
          %735 = vst.msk [vmem:[%s733 + $0x4] sm:$0xf] %vm709, %v730
          %736 = vrot.lane.b32.xlu0 %v705, 112
          %v737 = vpop.permute.xlu0 %736
          %738 = vrot.lane.b32.xlu0 %v706, 112
          %v739 = vpop.permute.xlu0 %738
          %s742 = scalar_lea.vmem [#allocation2], 16
          %743 = vst.msk [vmem:[%s742] sm:$0xf] %vm709, %v737
          %744 = vst.msk [vmem:[%s742 + $0x4] sm:$0xf] %vm709, %v739
          %745 = vrot.lane.b32.xlu0 %v707, 112
          %v746 = vpop.permute.xlu0 %745
          %747 = vrot.lane.b32.xlu0 %v708, 112
          %v748 = vpop.permute.xlu0 %747
          %s751 = scalar_lea.vmem [#allocation3], 16
          %752 = vst.msk [vmem:[%s751] sm:$0xf] %vm709, %v746
          %753 = vst.msk [vmem:[%s751 + $0x4] sm:$0xf] %vm709, %v748
          %754 = vrot.lane.b32.xlu0 %v705, 104
          %v755 = vpop.permute.xlu0 %754
          %756 = vrot.lane.b32.xlu0 %v706, 104
          %v757 = vpop.permute.xlu0 %756
          %s760 = scalar_lea.vmem [#allocation2], 24
          %761 = vst.msk [vmem:[%s760] sm:$0xf] %vm709, %v755
          %762 = vst.msk [vmem:[%s760 + $0x4] sm:$0xf] %vm709, %v757
          %763 = vrot.lane.b32.xlu0 %v707, 104
          %v764 = vpop.permute.xlu0 %763
          %765 = vrot.lane.b32.xlu0 %v708, 104
          %v766 = vpop.permute.xlu0 %765
          %s769 = scalar_lea.vmem [#allocation3], 24
          %770 = vst.msk [vmem:[%s769] sm:$0xf] %vm709, %v764
          %771 = vst.msk [vmem:[%s769 + $0x4] sm:$0xf] %vm709, %v766
        $region100: #{tpu_custom_call.1} parent=75 // pred_fallthru
          _
        %s772 = smul.u32 %s38, 8
        %s773 = sshra.s32 %s772, 3
        %s774 = sand.u32 %s772, 7
        %s775 = smul.addr %s773, 4
        %s776 = scalar_lea.vmem %s618, %s775
        %v777 = vld [vmem:[%s776] sm:$0xf]
        %v778 = vld [vmem:[#allocation9] sm:$0xf]
        %v779 = vld [vmem:[#allocation9 + $0x4] sm:$0xf]
        %v780 = vld [vmem:[#allocation9 + $0x8] sm:$0xf]
        %v781 = vld [vmem:[#allocation9 + $0xc] sm:$0xf]
        %v786 = vunpack.c.l.b16 %v778
        %v787 = vunpack.c.l.b16 %v779
        %v788 = vunpack.c.l.b16 %v780
        %v789 = vunpack.c.l.b16 %v781
        %v790 = vpack.c.b16 %v787, %v786
        %v791 = vpack.c.b16 %v789, %v788
        %vm794 = vcmask 261120
        %v796 = vsel %vm794, %v777, 0
        %798 = vmatpush.bf16.msra.mxu0 0
        %799 = vmatpush.bf16.msra.mxu0 0
        %800 = vmatpush.bf16.msra.mxu0 0
        %801 = vmatpush.bf16.msra.mxu0 0
        %802 = vmatpush.bf16.msra.mxu0 0
        %803 = vmatpush.bf16.msra.mxu0 0
        %804 = vmatpush.bf16.msra.mxu0 %v791
        %805 = vmatpush.bf16.msra.mxu0 %v790
        %806 = vmatmul.bf16.gmra.mxu0 %v796
        %v807 = vpop.f32.mrf.mxu0
        %v808 = vadd.f32 0.0, %v807
        %v809 = vpop.f32.mrf.mxu0
        %810 = vdwg.mxu0
        %v811 = vpack.c.bf16 %v808, %v808
        %vm812 = vcmask 60416
        %813 = vst.msk [vmem:[#allocation4] sm:$0xf] %vm812, %v811
        %815 = vrot.lane.b32.xlu0 %v811, 120
        %v816 = vpop.permute.xlu0 %815
        %s818 = scalar_lea.vmem [#allocation4], 4
        %819 = vst.msk [vmem:[%s818] sm:$0xf] %vm812, %v816
        %820 = vrot.lane.b32.xlu0 %v811, 112
        %v821 = vpop.permute.xlu0 %820
        %s823 = scalar_lea.vmem [#allocation4], 8
        %824 = vst.msk [vmem:[%s823] sm:$0xf] %vm812, %v821
        %825 = vrot.lane.b32.xlu0 %v811, 104
        %v826 = vpop.permute.xlu0 %825
        %s828 = scalar_lea.vmem [#allocation4], 12
        %829 = vst.msk [vmem:[%s828] sm:$0xf] %vm812, %v826
        loop: start=0, step=1, limit=4
        $region101: #{tpu_custom_call.1} parent=75 // loop_pre_header
          _
        $region102: #{tpu_custom_call.1} parent=75 // loop_header
          %s831 = sphi 0, %s835
          %p832 = scmp.ge.s32.totalorder %s831, 4
        $region103: #{tpu_custom_call.1} parent=75 // loop_header_branch
          %834 = sbr.rel (%p832) target = $region107
        $region104: #{tpu_custom_call.1} parent=75 // loop_body
          %s836 = smul.addr %s831, 4
          %s837 = scalar_lea.vmem [#allocation4], %s836
          %v838 = vld [vmem:[%s837] sm:$0xf]
          %s839 = smul.u32 %s831, 2
          %s840 = smul.addr %s839, 4
          %s841 = scalar_lea.vmem [#allocation2], %s840
          %v842 = vld [vmem:[%s841] sm:$0xf]
          %v843 = vld [vmem:[%s841 + $0x4] sm:$0xf]
          %s844 = smul.addr %s839, 4
          %s845 = scalar_lea.vmem [#allocation3], %s844
          %v846 = vld [vmem:[%s845] sm:$0xf]
          %v847 = vld [vmem:[%s845 + $0x4] sm:$0xf]
          %v850 = vunpack.c.l.b16 %v842
          %v851 = vunpack.c.l.b16 %v843
          %v852 = vpack.c.b16 %v851, %v850
          %vm853 = vcmask 64512
          %v855 = vsel %vm853, %v838, 0
          %v858 = vsel %vm853, %v852, 0
          %860 = vmatpush.bf16.xpose.msra.mxu0 0
          %861 = vmatpush.bf16.xpose.msra.mxu0 0
          %862 = vmatpush.bf16.xpose.msra.mxu0 0
          %863 = vmatpush.bf16.xpose.msra.mxu0 0
          %864 = vmatpush.bf16.xpose.msra.mxu0 0
          %865 = vmatpush.bf16.xpose.msra.mxu0 0
          %866 = vmatpush.bf16.xpose.msra.mxu0 0
          %867 = vmatpush.bf16.xpose.msra.mxu0 %v858
          %868 = vmatmul.bf16.gmra.mxu0 %v855
          %v869 = vpop.f32.mrf.mxu0
          %v870 = vadd.f32 0.0, %v869
          %v871 = vpop.f32.mrf.mxu0
          %872 = vdwg.mxu0
          %vm873 = vcmask 130048
          %v874 = vsel %vm873, %v870, -inf
          %875 = vmax.xlane.f32.xlu0 %v874
          %v876 = vpop.xlane.xlu0 %875
          %v877 = vsub.f32 %v870, %v876
          %v878 = vpack.c.bf16 %v877, %v877
          %v879 = vunpack.c.l.bf16 %v878
          %v880 = vmul.f32 %v879, 1.442695
          %v881 = vpow.pop %v880
          %v882 = vpack.c.bf16 %v881, %v881
          %v883 = vunpack.c.l.bf16 %v882
          %v884 = vsel %vm873, %v883, 0.0
          %885 = vadd.xlane.f32.xlu0 %v884
          %v886 = vpop.xlane.xlu0 %885
          %v889 = vunpack.c.l.b16 %v846
          %v890 = vunpack.c.l.b16 %v847
          %v891 = vpack.c.b16 %v890, %v889
          %v894 = vsel %vm873, %v882, 0
          %896 = vmatpush.bf16.msra.mxu0 0
          %897 = vmatpush.bf16.msra.mxu0 0
          %898 = vmatpush.bf16.msra.mxu0 0
          %899 = vmatpush.bf16.msra.mxu0 0
          %900 = vmatpush.bf16.msra.mxu0 0
          %901 = vmatpush.bf16.msra.mxu0 0
          %902 = vmatpush.bf16.msra.mxu0 0
          %903 = vmatpush.bf16.msra.mxu0 %v891
          %904 = vmatmul.bf16.gmra.mxu0 %v894
          %v905 = vpop.f32.mrf.mxu0
          %v906 = vadd.f32 0.0, %v905
          %v907 = vpop.f32.mrf.mxu0
          %908 = vdwg.mxu0
          %v909 = vrcp.pop %v886
          %v910 = vmul.f32 %v906, %v909
          %s911 = smul.u32 %s831, 8
          %s912 = scalar_lea.vmem [#allocation5], %s911
          %913 = vst.msk [vmem:[%s912] sm:$0xff] %vm853, %v910
        $region105: #{tpu_custom_call.1} parent=75 // loop_footer
          %s835 = sadd.s32 1, %s831
        $region106: #{tpu_custom_call.1} parent=75 // loop_footer_branch
          %830 = sbr.rel target = $region102
        $region107: #{tpu_custom_call.1} parent=75 // loop_exit
          _
        %v914 = vld [vmem:[#allocation5] sm:$0xff]
        %s915 = scalar_lea.vmem [#allocation5], 8
        %v916 = vld [vmem:[%s915] sm:$0xff]
        %s917 = scalar_lea.vmem [#allocation5], 16
        %v918 = vld [vmem:[%s917] sm:$0xff]
        %s919 = scalar_lea.vmem [#allocation5], 24
        %v920 = vld [vmem:[%s919] sm:$0xff]
        %922 = vrot.lane.b32.xlu0 %v916, 8
        %v923 = vpop.permute.xlu0 %922
        %926 = vrot.lane.b32.xlu0 %v918, 16
        %v927 = vpop.permute.xlu0 %926
        %930 = vrot.lane.b32.xlu0 %v920, 24
        %v931 = vpop.permute.xlu0 %930
        %vm933 = vcmask 64512
        %v934 = vsel %vm933, %v914, %v923
        %vm935 = vcmask 130048
        %v936 = vsel %vm935, %v934, %v927
        %vm937 = vcmask 195584
        %v938 = vsel %vm937, %v936, %v931
        %v939 = vld [vmem:[%s613] sm:$0xff]
        %v940 = vadd.f32 %v939, %v938
        %v941 = vsel %vm794, %v940, 0.0
        %942 = vadd.xlane.f32.xlu0 %v941
        %v943 = vpop.xlane.xlu0 %942
        %v944 = vrcp.pop 32.0
        %v945 = vmul.f32 32.0, %v944
        %v946 = vsub.f32 1.0, %v945
        %v947 = vmul.f32 %v944, %v946
        %v948 = vadd.f32 %v944, %v947
        %vm949 = vweird.f32 %v944
        %v950 = vsel %vm949, %v944, %v948
        %v951 = vmul.f32 %v943, %v950
        %v952 = vsub.f32 %v940, %v951
        %v953 = vmul.f32 %v952, %v952
        %v954 = vsel %vm794, %v953, 0.0
        %955 = vadd.xlane.f32.xlu0 %v954
        %v956 = vpop.xlane.xlu0 %955
        %v957 = vmul.f32 %v956, %v950
        %v958 = vadd.f32 %v957, 1e-05
        %v959 = vrsqrt.pop %v958
        %v960 = vmul.f32 %v959, %v958
        %v961 = vmul.f32 %v960, %v959
        %v962 = vmul.f32 0.5, %v961
        %v963 = vsub.f32 1.5, %v962
        %v964 = vmul.f32 %v959, %v963
        %vm965 = vweird.f32 %v958
        %vm966 = vweird.f32 %v959
        %vm967 = vmor %vm965, %vm966
        %v968 = vsel %vm967, %v959, %v964
        %v969 = vmul.f32 %v952, %v968
        %v970 = vld [vmem:[%s6] sm:$0x1]
        %v972 = vperm.slane %v970, 0
        %v974 = vmul.f32 %v969, %v972
        %v975 = vld [vmem:[%s7] sm:$0x1]
        %v977 = vperm.slane %v975, 0
        %v979 = vadd.f32 %v974, %v977
        %v980 = vpack.c.bf16 %v979, %v979
        %v981 = vld [vmem:[#allocation14] sm:$0xf]
        %v982 = vld [vmem:[#allocation14 + $0x4] sm:$0xf]
        %v983 = vld [vmem:[#allocation14 + $0x8] sm:$0xf]
        %v984 = vld [vmem:[#allocation14 + $0xc] sm:$0xf]
        %v985 = vld [vmem:[%s9] sm:$0x1]
        %v987 = vperm.slane %v985, 0
        %v993 = vunpack.c.l.b16 %v981
        %v994 = vunpack.c.l.b16 %v982
        %v995 = vunpack.c.l.b16 %v983
        %v996 = vunpack.c.l.b16 %v984
        %v997 = vpack.c.b16 %v994, %v993
        %v998 = vpack.c.b16 %v996, %v995
        %v1002 = vsel %vm794, %v980, 0
        %1004 = vmatpush.bf16.msra.mxu0 0
        %1005 = vmatpush.bf16.msra.mxu0 0
        %1006 = vmatpush.bf16.msra.mxu0 0
        %1007 = vmatpush.bf16.msra.mxu0 0
        %1008 = vmatpush.bf16.msra.mxu0 0
        %1009 = vmatpush.bf16.msra.mxu0 0
        %1010 = vmatpush.bf16.msra.mxu0 %v998
        %1011 = vmatpush.bf16.msra.mxu0 %v997
        %1012 = vmatmul.bf16.gmra.mxu0 %v1002
        %v1013 = vpop.f32.mrf.mxu0
        %v1014 = vadd.f32 %v987, %v1013
        %v1015 = vpop.f32.mrf.mxu0
        %1016 = vdwg.mxu0
        %v1017 = vmax.f32 %v1014, 0.0
        %v1018 = vpack.c.bf16 %v1017, %v1017
        %v1019 = vld [vmem:[%s10] sm:$0xf]
        %v1020 = vld [vmem:[%s10 + $0x4] sm:$0xf]
        %v1021 = vld [vmem:[%s10 + $0x8] sm:$0xf]
        %v1022 = vld [vmem:[%s10 + $0xc] sm:$0xf]
        %v1023 = vld [vmem:[%s10 + $0x10] sm:$0xf]
        %v1024 = vld [vmem:[%s10 + $0x14] sm:$0xf]
        %v1025 = vld [vmem:[%s10 + $0x18] sm:$0xf]
        %v1026 = vld [vmem:[%s10 + $0x1c] sm:$0xf]
        %v1027 = vld [vmem:[%s11] sm:$0x1]
        %v1029 = vperm.slane %v1027, 0
        %v1039 = vunpack.c.l.b16 %v1019
        %v1040 = vunpack.c.l.b16 %v1020
        %v1041 = vunpack.c.l.b16 %v1021
        %v1042 = vunpack.c.l.b16 %v1022
        %v1043 = vunpack.c.l.b16 %v1023
        %v1044 = vunpack.c.l.b16 %v1024
        %v1045 = vunpack.c.l.b16 %v1025
        %v1046 = vunpack.c.l.b16 %v1026
        %v1047 = vpack.c.b16 %v1040, %v1039
        %v1048 = vpack.c.b16 %v1042, %v1041
        %v1049 = vpack.c.b16 %v1044, %v1043
        %v1050 = vpack.c.b16 %v1046, %v1045
        %vm1055 = vcmask 523264
        %v1057 = vsel %vm1055, %v1018, 0
        %1059 = vmatpush.bf16.msra.mxu0 0
        %1060 = vmatpush.bf16.msra.mxu0 0
        %1061 = vmatpush.bf16.msra.mxu0 0
        %1062 = vmatpush.bf16.msra.mxu0 0
        %1063 = vmatpush.bf16.msra.mxu0 %v1050
        %1064 = vmatpush.bf16.msra.mxu0 %v1049
        %1065 = vmatpush.bf16.msra.mxu0 %v1048
        %1066 = vmatpush.bf16.msra.mxu0 %v1047
        %1067 = vmatmul.bf16.gmra.mxu0 %v1057
        %v1068 = vpop.f32.mrf.mxu0
        %v1069 = vadd.f32 %v1029, %v1068
        %v1070 = vpop.f32.mrf.mxu0
        %1071 = vdwg.mxu0
        %v1072 = vadd.f32 %v979, %v1069
        %v1073 = vsel %vm794, %v1072, 0.0
        %1074 = vadd.xlane.f32.xlu0 %v1073
        %v1075 = vpop.xlane.xlu0 %1074
        %v1076 = vmul.f32 %v1075, %v950
        %v1077 = vsub.f32 %v1072, %v1076
        %v1078 = vmul.f32 %v1077, %v1077
        %v1079 = vsel %vm794, %v1078, 0.0
        %1080 = vadd.xlane.f32.xlu0 %v1079
        %v1081 = vpop.xlane.xlu0 %1080
        %v1082 = vmul.f32 %v1081, %v950
        %v1083 = vadd.f32 %v1082, 1e-05
        %v1084 = vrsqrt.pop %v1083
        %v1085 = vmul.f32 %v1084, %v1083
        %v1086 = vmul.f32 %v1085, %v1084
        %v1087 = vmul.f32 0.5, %v1086
        %v1088 = vsub.f32 1.5, %v1087
        %v1089 = vmul.f32 %v1084, %v1088
        %vm1090 = vweird.f32 %v1083
        %vm1091 = vweird.f32 %v1084
        %vm1092 = vmor %vm1090, %vm1091
        %v1093 = vsel %vm1092, %v1084, %v1089
        %v1094 = vmul.f32 %v1077, %v1093
        %v1095 = vld [vmem:[%s12] sm:$0x1]
        %v1097 = vperm.slane %v1095, 0
        %v1099 = vmul.f32 %v1094, %v1097
        %v1100 = vld [vmem:[%s13] sm:$0x1]
        %v1102 = vperm.slane %v1100, 0
        %v1104 = vadd.f32 %v1099, %v1102
        %1105 = vst.msk [vmem:[%s605] sm:$0xff] %vm794, %v1104
        %s1106 = sand.u32 %s366, 1
        %s1107 = scalar_lea.sflag [#allocation8], %s1106
        %s1108 = sand.u32 %s366, 1
        %s1109 = smul.addr %s1108, 8
        %s1110 = scalar_lea.vmem [#allocation15], %s1109
        // Predicated region
        $region108: #{tpu_custom_call.1} parent=75 // pred_check
          %p1111 = pneg %p376
        $region109: #{tpu_custom_call.1} parent=75 // pred_check_branch
          %1113 = sbr.rel (%p1111) target = $region111
        $region110: #{tpu_custom_call.1} parent=75 // pred_region
          %1115 = vsyncadd %s1107, 0
          %s1116 = smul.addr %s37, 2
          %s1117 = sadd.s32 %s38, %s1116
          %s1118 = smul.addr %s1117, 8
          %s1119 = scalar_lea.hbm %s14, %s1118
          %s1121 = sshll.u32 %s1110, 4
          %s1122 = int_to_ptr.vmem [resolvable:$true] %s1121
          %s1123 = sshll.u32 %s1119, 4
          %s1124 = int_to_ptr.hbm [resolvable:$true] %s1123
          %1126 = dma.vmem_to_hbm [thread:$0]  %s1122, 128, %s1124, %s1107
        $region111: #{tpu_custom_call.1} parent=75 // pred_fallthru
          _
      $region76: #{tpu_custom_call.1} parent=5 // pred_fallthru
        _
      %p1127 = scmp.le.s32.totalorder 2, %s28
      // Predicated region
      $region112: #{tpu_custom_call.1} parent=5 // pred_check
        %p1128 = pneg %p1127
      $region113: #{tpu_custom_call.1} parent=5 // pred_check_branch
        %1130 = sbr.rel (%p1128) target = $region115
      $region114: #{tpu_custom_call.1} parent=5 // pred_region
        %s1131 = ssub.s32 %s28, 2
        // Predicated region
        $region116: #{tpu_custom_call.1} parent=114 // pred_check
          %p1132 = pneg %p382
        $region117: #{tpu_custom_call.1} parent=114 // pred_check_branch
          %1134 = sbr.rel (%p1132) target = $region119
        $region118: #{tpu_custom_call.1} parent=114 // pred_region
          %s1135 = sand.u32 %s367, 1
          %s1136 = scalar_lea.sflag [#allocation8], %s1135
          %s1137 = sand.u32 %s367, 1
          %s1138 = smul.addr %s1137, 8
          %s1139 = scalar_lea.vmem [#allocation15], %s1138
          %1141 = dma.done %s1136, 128
        $region119: #{tpu_custom_call.1} parent=114 // pred_fallthru
          _
      $region115: #{tpu_custom_call.1} parent=5 // pred_fallthru
        _
    $region6: #{tpu_custom_call.1} parent=1 // loop_footer
      %s32 = sadd.s32 1, %s28
    $region7: #{tpu_custom_call.1} parent=1 // loop_footer_branch
      %27 = sbr.rel target = $region3
    $region8: #{tpu_custom_call.1} parent=1 // loop_exit
      _
    %1142 = vsyncpa [#allocation7], 1
    %s1143 = scalar_lea.sflag [#allocation7], 1
    %1144 = vsyncpa %s1143, 1
    %1145 = vsyncpa [#allocation10], 1
    %1146 = vsyncpa [#allocation13], 1
    %1147 = vsyncpa [#allocation8], 1
    %s1148 = scalar_lea.sflag [#allocation8], 1
    %1149 = vsyncpa %s1148, 1

</llo_original>
